<compile_context>
chip_gen: v6e
topology: v6e:2x2x1
jax: 0.10.0
libtpu: 0.0.40
codegen_flags: <defaults>
</compile_context>

<pallas_src>
import jax
import jax.numpy as jnp
from jax import lax
from jax.experimental import pallas as pl
from jax.experimental.pallas import tpu as pltpu

L = 325            # sequence length == Linear feature size
LP = 384           # lane-padded feature size (3 * 128)
K = 7              # Conv1d kernel size (padding=3, stride=1 -> "same")
PAD = K // 2
TB_MAX = 512       # batch tile (multiple of 8); 512 and 1024 measured equal at roofline

# The roll-based conv wraps its left taps into padded lanes [LP-PAD, LP); that
# is only harmless because LP - L >= PAD and because the padded weight columns
# of W2^T/W3^T are zero (so garbage in padded activation lanes never mixes in).
assert LP - L >= PAD


def _round_up(n, m):
    return (n + m - 1) // m * m


def _conv7_same(y, w_ref, b_ref):
    """PyTorch Conv1d(1,1,7,pad=3) cross-correlation on a lane-padded tile.

    y: (TB, LP) f32 with lanes [L, LP) ~= 0 (that zero region provides both the
    left wrap-around halo and the right halo for pltpu.roll shifts).
    """
    acc = w_ref[PAD] * y
    for k in range(K):                       # static unroll, 6 rolled taps
        if k == PAD:
            continue
        shifted = pltpu.roll(y, shift=(PAD - k) % LP, axis=1)   # XLU rotate
        acc = acc + w_ref[k] * shifted
    return acc + b_ref[0]


def _sigmoid(x):
    # Single EUP transcendental (tanh); exact sigmoid, no overflow edge cases.
    return 0.5 * jnp.tanh(0.5 * x) + 0.5


def neuralnet_kernel(w1_ref, b1_ref, w4_ref, b4_ref,        # SMEM conv params
                     x_ref, W2T_ref, b2_ref, W3T_ref, b3_ref,  # VMEM tensors
                     o_ref, pad_ref):
    # Rebuild the lane-padded activation tile in VMEM scratch: lanes [L, LP)
    # must be zero (conv halo).  Tail-zero + valid-lane store each grid step
    # (do NOT gate on program_id==0: grid steps may be sharded across cores).
    tb = pad_ref.shape[0]
    pad_ref[:, L:] = jnp.zeros((tb, LP - L), jnp.float32)
    pad_ref[:, :L] = x_ref[...]
    h = pad_ref[...]                                          # (TB, LP) f32

    # l1: Conv1d(1,1,7,pad=3) + ReLU
    h = jnp.maximum(_conv7_same(h, w1_ref, b1_ref), 0.0)

    # l2: Linear(325,325) + Sigmoid.  W2T is the padded transpose (in, out) in
    # bf16, so this is the plain NN matmul path on the MXU (no transpose).
    # Padded input rows of W2T are zero, so garbage in padded lanes of h never
    # propagates.
    h = jnp.dot(h.astype(jnp.bfloat16), W2T_ref[...],
                preferred_element_type=jnp.float32) + b2_ref[...]
    h = _sigmoid(h)

    # l3: Linear(325,325) + Sigmoid.  b3's padded lanes were pre-filled with
    # -30, and W3T's padded output columns are zero, so padded lanes come out
    # as sigmoid(-30) ~= 0 -- exactly the zero halo the second conv needs.
    h = jnp.dot(h.astype(jnp.bfloat16), W3T_ref[...],
                preferred_element_type=jnp.float32) + b3_ref[...]
    h = _sigmoid(h)

    # l4: Conv1d(1,1,7,pad=3) + ReLU
    h = jnp.maximum(_conv7_same(h, w4_ref, b4_ref), 0.0)

    # Store only the 325 valid lanes (output array is un-padded).
    o_ref[...] = h[:, :L].astype(o_ref.dtype)


def prepare_params(params):
    """One-time param prep: pad + transpose the Linear weights to (in=384,
    out=384) bf16, pad biases; b3's dead lanes get -30 (sigmoid -> ~0)."""
    w1, b1, W2, b2, W3, b3, w4, b4 = params
    pw = ((0, LP - L), (0, LP - L))
    W2T = jnp.pad(W2.astype(jnp.float32), pw).T.astype(jnp.bfloat16)
    W3T = jnp.pad(W3.astype(jnp.float32), pw).T.astype(jnp.bfloat16)
    b2p = jnp.pad(b2.astype(jnp.float32), (0, LP - L)).reshape(1, LP)
    b3p = jnp.pad(b3.astype(jnp.float32), (0, LP - L),
                  constant_values=-30.0).reshape(1, LP)
    return (w1.astype(jnp.float32), b1.astype(jnp.float32),
            w4.astype(jnp.float32), b4.astype(jnp.float32),
            W2T, b2p, W3T, b3p)


def neural_net_forward(x, prepared):
    """x: (B, 1, L) float32, NCW like PyTorch. Returns (B, 1, L) float32."""
    w1, b1, w4, b4, W2T, b2p, W3T, b3p = prepared
    B = x.shape[0]
    x2 = x.reshape(B, L).astype(jnp.float32)      # channel squeeze, no copy

    # Only pad the batch (sublane) axis, and only when B isn't a multiple of 8;
    # batches that already are take a zero-copy path.  No lane padding here.
    B8 = _round_up(max(B, 1), 8)
    if B8 != B:
        x2 = jnp.pad(x2, ((0, B8 - B), (0, 0)))

    TB = min(TB_MAX, B8)
    if B8 >= 16:
        # Keep >=2 grid steps so v7x's two TensorCores (parallel axis) both get
        # work; also keeps the per-core input/output pipeline fed.
        TB = min(TB, _round_up(pl.cdiv(B8, 2), 8))
    grid = (pl.cdiv(B8, TB),)

    smem = pl.BlockSpec(memory_space=pltpu.MemorySpace.SMEM)

    out = pl.pallas_call(
        neuralnet_kernel,
        out_shape=jax.ShapeDtypeStruct((B8, L), jnp.float32),
        grid=grid,
        in_specs=[smem, smem, smem, smem,                       # w1, b1, w4, b4
                  pl.BlockSpec((TB, L), lambda i: (i, 0)),      # x tile (full 325 lanes)
                  pl.BlockSpec((LP, LP), lambda i: (0, 0)),     # W2^T (resident)
                  pl.BlockSpec((1, LP), lambda i: (0, 0)),      # b2
                  pl.BlockSpec((LP, LP), lambda i: (0, 0)),     # W3^T (resident)
                  pl.BlockSpec((1, LP), lambda i: (0, 0))],     # b3 (-30 padded)
        out_specs=pl.BlockSpec((TB, L), lambda i: (i, 0)),
        scratch_shapes=[pltpu.VMEM((TB, LP), jnp.float32)],     # lane-padded tile
        compiler_params=pltpu.CompilerParams(
            dimension_semantics=("parallel",),
            vmem_limit_bytes=40 * 1024 * 1024),
    )(w1, b1, w4, b4, x2, W2T, b2p, W3T, b3p)

    if B8 != B:
        out = out[:B]
    return out.reshape(B, 1, L)


def init_params(key):
    """Deterministic PyTorch-style uniform init (bounds = 1/sqrt(fan_in))."""
    ks = jax.random.split(key, 8)
    cb = 1.0 / (K ** 0.5)   # Conv1d: fan_in = in_channels * kernel_size = 7
    lb = 1.0 / (L ** 0.5)   # Linear: fan_in = 325
    w1 = jax.random.uniform(ks[0], (K,), jnp.float32, -cb, cb)
    b1 = jax.random.uniform(ks[1], (1,), jnp.float32, -cb, cb)
    W2 = jax.random.uniform(ks[2], (L, L), jnp.float32, -lb, lb)
    b2 = jax.random.uniform(ks[3], (L,), jnp.float32, -lb, lb)
    W3 = jax.random.uniform(ks[4], (L, L), jnp.float32, -lb, lb)
    b3 = jax.random.uniform(ks[5], (L,), jnp.float32, -lb, lb)
    w4 = jax.random.uniform(ks[6], (K,), jnp.float32, -cb, cb)
    b4 = jax.random.uniform(ks[7], (1,), jnp.float32, -cb, cb)
    return w1, b1, W2, b2, W3, b3, w4, b4


def reference_forward(x, params):
    """Pure-JAX f32 reference matching the PyTorch module."""
    w1, b1, W2, b2, W3, b3, w4, b4 = params

    def conv(y, w, b):
        out = lax.conv_general_dilated(
            y, w.reshape(1, 1, K), window_strides=(1,), padding=[(PAD, PAD)],
            dimension_numbers=("NCH", "OIH", "NCH"))
        return out + b

    h = jax.nn.relu(conv(x, w1, b1))
    h = jax.nn.sigmoid(h @ W2.T + b2)
    h = jax.nn.sigmoid(h @ W3.T + b3)
    h = jax.nn.relu(conv(h, w4, b4))
    return h


if __name__ == "__main__":
    key = jax.random.PRNGKey(0)
    pkey, xkey = jax.random.split(key)
    params = init_params(pkey)
    prepared = prepare_params(params)          # one-time pad + transpose + bf16 cast

    B = 2
    x = jax.random.normal(xkey, (B, 1, L), jnp.float32)

    fwd = jax.jit(neural_net_forward)
    out = jax.block_until_ready(fwd(x, prepared))

    assert out.shape == (B, 1, L), out.shape
    ref = reference_forward(x, params)
    # bf16 matmul operands (f32 accumulation) vs the f32 reference: ~1e-3
    # relative error, intentional and inside the tolerance below.
    if not bool(jnp.allclose(out, ref, atol=1e-2, rtol=1e-2)):
        raise AssertionError("Pallas kernel deviates from JAX reference")

    print("KERNEL_OK")
</pallas_src>

<mosaic_0001>
module attributes {stable_mosaic.version = 11 : i64} {
  func.func @neuralnet_kernel(%arg0: i32, %arg1: memref<7xf32, #tpu.memory_space<smem>>, %arg2: memref<1xf32, #tpu.memory_space<smem>>, %arg3: memref<7xf32, #tpu.memory_space<smem>>, %arg4: memref<1xf32, #tpu.memory_space<smem>>, %arg5: memref<8x325xf32, #tpu.memory_space<vmem>>, %arg6: memref<384x384xbf16, #tpu.memory_space<vmem>>, %arg7: memref<1x384xf32, #tpu.memory_space<vmem>>, %arg8: memref<384x384xbf16, #tpu.memory_space<vmem>>, %arg9: memref<1x384xf32, #tpu.memory_space<vmem>>, %arg10: memref<8x325xf32, #tpu.memory_space<vmem>>, %arg11: memref<8x384xf32, #tpu.memory_space<vmem>>) attributes {dimension_semantics = [#tpu.dimension_semantics<parallel>], iteration_bounds = array<i64: 1>, scalar_prefetch = 0 : i64, scratch_operands = 1 : i64, tpu.core_type = #tpu.core_type<tc>, window_params = [{transform_indices = @transform_0, window_bounds = array<i64: 7>}, {transform_indices = @transform_1, window_bounds = array<i64: 1>}, {transform_indices = @transform_2, window_bounds = array<i64: 7>}, {transform_indices = @transform_3, window_bounds = array<i64: 1>}, {transform_indices = @transform_4, window_bounds = array<i64: 8, 325>}, {pipeline_mode = #tpu.pipeline_mode<synchronous>, transform_indices = @transform_5, window_bounds = array<i64: 384, 384>}, {pipeline_mode = #tpu.pipeline_mode<synchronous>, transform_indices = @transform_6, window_bounds = array<i64: 1, 384>}, {pipeline_mode = #tpu.pipeline_mode<synchronous>, transform_indices = @transform_7, window_bounds = array<i64: 384, 384>}, {pipeline_mode = #tpu.pipeline_mode<synchronous>, transform_indices = @transform_8, window_bounds = array<i64: 1, 384>}, {transform_indices = @transform_9, window_bounds = array<i64: 8, 325>}]} {
    %cst = arith.constant 0.000000e+00 : f32
    %0 = vector.broadcast %cst : f32 to vector<8x59xf32>
    %c0 = arith.constant 0 : index
    %c325 = arith.constant 325 : index
    %1 = vector.load %arg11[%c0, %c325] : memref<8x384xf32, #tpu.memory_space<vmem>>, vector<8x59xf32>
    tpu.vector_store %arg11[%c0, %c325], %0 {strides = array<i32>} : memref<8x384xf32, #tpu.memory_space<vmem>>, vector<8x59xf32>,
    %c0_0 = arith.constant 0 : index
    %c0_1 = arith.constant 0 : index
    %2 = vector.load %arg5[%c0_0, %c0_1] : memref<8x325xf32, #tpu.memory_space<vmem>>, vector<8x325xf32>
    %c0_2 = arith.constant 0 : index
    %c0_3 = arith.constant 0 : index
    %3 = vector.load %arg11[%c0_2, %c0_3] : memref<8x384xf32, #tpu.memory_space<vmem>>, vector<8x325xf32>
    tpu.vector_store %arg11[%c0_2, %c0_3], %2 {strides = array<i32>} : memref<8x384xf32, #tpu.memory_space<vmem>>, vector<8x325xf32>,
    %c0_4 = arith.constant 0 : index
    %c0_5 = arith.constant 0 : index
    %4 = vector.load %arg11[%c0_4, %c0_5] : memref<8x384xf32, #tpu.memory_space<vmem>>, vector<8x384xf32>
    %c3 = arith.constant 3 : index
    %5 = memref.load %arg1[%c3] : memref<7xf32, #tpu.memory_space<smem>>
    %6 = vector.broadcast %5 : f32 to vector<8x384xf32>
    %7 = arith.mulf %6, %4 : vector<8x384xf32>
    %c3_i32 = arith.constant 3 : i32
    %8 = tpu.dynamic_rotate %4 by %c3_i32 dim 1 : vector<8x384xf32>, i32 -> vector<8x384xf32>
    %c0_6 = arith.constant 0 : index
    %9 = memref.load %arg1[%c0_6] : memref<7xf32, #tpu.memory_space<smem>>
    %10 = vector.broadcast %9 : f32 to vector<8x384xf32>
    %11 = arith.mulf %10, %8 : vector<8x384xf32>
    %12 = arith.addf %7, %11 : vector<8x384xf32>
    %c2_i32 = arith.constant 2 : i32
    %13 = tpu.dynamic_rotate %4 by %c2_i32 dim 1 : vector<8x384xf32>, i32 -> vector<8x384xf32>
    %c1 = arith.constant 1 : index
    %14 = memref.load %arg1[%c1] : memref<7xf32, #tpu.memory_space<smem>>
    %15 = vector.broadcast %14 : f32 to vector<8x384xf32>
    %16 = arith.mulf %15, %13 : vector<8x384xf32>
    %17 = arith.addf %12, %16 : vector<8x384xf32>
    %c1_i32 = arith.constant 1 : i32
    %18 = tpu.dynamic_rotate %4 by %c1_i32 dim 1 : vector<8x384xf32>, i32 -> vector<8x384xf32>
    %c2 = arith.constant 2 : index
    %19 = memref.load %arg1[%c2] : memref<7xf32, #tpu.memory_space<smem>>
    %20 = vector.broadcast %19 : f32 to vector<8x384xf32>
    %21 = arith.mulf %20, %18 : vector<8x384xf32>
    %22 = arith.addf %17, %21 : vector<8x384xf32>
    %c383_i32 = arith.constant 383 : i32
    %23 = tpu.dynamic_rotate %4 by %c383_i32 dim 1 : vector<8x384xf32>, i32 -> vector<8x384xf32>
    %c4 = arith.constant 4 : index
    %24 = memref.load %arg1[%c4] : memref<7xf32, #tpu.memory_space<smem>>
    %25 = vector.broadcast %24 : f32 to vector<8x384xf32>
    %26 = arith.mulf %25, %23 : vector<8x384xf32>
    %27 = arith.addf %22, %26 : vector<8x384xf32>
    %c382_i32 = arith.constant 382 : i32
    %28 = tpu.dynamic_rotate %4 by %c382_i32 dim 1 : vector<8x384xf32>, i32 -> vector<8x384xf32>
    %c5 = arith.constant 5 : index
    %29 = memref.load %arg1[%c5] : memref<7xf32, #tpu.memory_space<smem>>
    %30 = vector.broadcast %29 : f32 to vector<8x384xf32>
    %31 = arith.mulf %30, %28 : vector<8x384xf32>
    %32 = arith.addf %27, %31 : vector<8x384xf32>
    %c381_i32 = arith.constant 381 : i32
    %33 = tpu.dynamic_rotate %4 by %c381_i32 dim 1 : vector<8x384xf32>, i32 -> vector<8x384xf32>
    %c6 = arith.constant 6 : index
    %34 = memref.load %arg1[%c6] : memref<7xf32, #tpu.memory_space<smem>>
    %35 = vector.broadcast %34 : f32 to vector<8x384xf32>
    %36 = arith.mulf %35, %33 : vector<8x384xf32>
    %37 = arith.addf %32, %36 : vector<8x384xf32>
    %c0_7 = arith.constant 0 : index
    %38 = memref.load %arg2[%c0_7] : memref<1xf32, #tpu.memory_space<smem>>
    %39 = vector.broadcast %38 : f32 to vector<8x384xf32>
    %40 = arith.addf %37, %39 : vector<8x384xf32>
    %cst_8 = arith.constant 0.000000e+00 : f32
    %41 = vector.broadcast %cst_8 : f32 to vector<8x384xf32>
    %42 = arith.maximumf %40, %41 : vector<8x384xf32>
    %43 = arith.truncf %42 : vector<8x384xf32> to vector<8x384xbf16>
    %c0_9 = arith.constant 0 : index
    %c0_10 = arith.constant 0 : index
    %44 = vector.load %arg6[%c0_9, %c0_10] : memref<384x384xbf16, #tpu.memory_space<vmem>>, vector<384x384xbf16>
    %cst_11 = arith.constant dense<0.000000e+00> : vector<8x384xf32>
    %45 = tpu.matmul %43, %44, %cst_11 {dimension_numbers = #tpu.dot_dimension_numbers<[1], [0], [0], [1], [0, 0, 1, 1], [], []>} : vector<8x384xbf16>, vector<384x384xbf16>, vector<8x384xf32> -> vector<8x384xf32>
    %c0_12 = arith.constant 0 : index
    %c0_13 = arith.constant 0 : index
    %46 = vector.load %arg7[%c0_12, %c0_13] : memref<1x384xf32, #tpu.memory_space<vmem>>, vector<1x384xf32>
    %47 = vector.broadcast %46 : vector<1x384xf32> to vector<8x384xf32>
    %48 = arith.addf %45, %47 : vector<8x384xf32>
    %cst_14 = arith.constant 5.000000e-01 : f32
    %49 = vector.broadcast %cst_14 : f32 to vector<8x384xf32>
    %50 = arith.mulf %49, %48 : vector<8x384xf32>
    %51 = math.tanh %50 : vector<8x384xf32>
    %cst_15 = arith.constant 5.000000e-01 : f32
    %52 = vector.broadcast %cst_15 : f32 to vector<8x384xf32>
    %53 = arith.mulf %52, %51 : vector<8x384xf32>
    %cst_16 = arith.constant 5.000000e-01 : f32
    %54 = vector.broadcast %cst_16 : f32 to vector<8x384xf32>
    %55 = arith.addf %53, %54 : vector<8x384xf32>
    %56 = arith.truncf %55 : vector<8x384xf32> to vector<8x384xbf16>
    %c0_17 = arith.constant 0 : index
    %c0_18 = arith.constant 0 : index
    %57 = vector.load %arg8[%c0_17, %c0_18] : memref<384x384xbf16, #tpu.memory_space<vmem>>, vector<384x384xbf16>
    %cst_19 = arith.constant dense<0.000000e+00> : vector<8x384xf32>
    %58 = tpu.matmul %56, %57, %cst_19 {dimension_numbers = #tpu.dot_dimension_numbers<[1], [0], [0], [1], [0, 0, 1, 1], [], []>} : vector<8x384xbf16>, vector<384x384xbf16>, vector<8x384xf32> -> vector<8x384xf32>
    %c0_20 = arith.constant 0 : index
    %c0_21 = arith.constant 0 : index
    %59 = vector.load %arg9[%c0_20, %c0_21] : memref<1x384xf32, #tpu.memory_space<vmem>>, vector<1x384xf32>
    %60 = vector.broadcast %59 : vector<1x384xf32> to vector<8x384xf32>
    %61 = arith.addf %58, %60 : vector<8x384xf32>
    %cst_22 = arith.constant 5.000000e-01 : f32
    %62 = vector.broadcast %cst_22 : f32 to vector<8x384xf32>
    %63 = arith.mulf %62, %61 : vector<8x384xf32>
    %64 = math.tanh %63 : vector<8x384xf32>
    %cst_23 = arith.constant 5.000000e-01 : f32
    %65 = vector.broadcast %cst_23 : f32 to vector<8x384xf32>
    %66 = arith.mulf %65, %64 : vector<8x384xf32>
    %cst_24 = arith.constant 5.000000e-01 : f32
    %67 = vector.broadcast %cst_24 : f32 to vector<8x384xf32>
    %68 = arith.addf %66, %67 : vector<8x384xf32>
    %c3_25 = arith.constant 3 : index
    %69 = memref.load %arg3[%c3_25] : memref<7xf32, #tpu.memory_space<smem>>
    %70 = vector.broadcast %69 : f32 to vector<8x384xf32>
    %71 = arith.mulf %70, %68 : vector<8x384xf32>
    %c3_i32_26 = arith.constant 3 : i32
    %72 = tpu.dynamic_rotate %68 by %c3_i32_26 dim 1 : vector<8x384xf32>, i32 -> vector<8x384xf32>
    %c0_27 = arith.constant 0 : index
    %73 = memref.load %arg3[%c0_27] : memref<7xf32, #tpu.memory_space<smem>>
    %74 = vector.broadcast %73 : f32 to vector<8x384xf32>
    %75 = arith.mulf %74, %72 : vector<8x384xf32>
    %76 = arith.addf %71, %75 : vector<8x384xf32>
    %c2_i32_28 = arith.constant 2 : i32
    %77 = tpu.dynamic_rotate %68 by %c2_i32_28 dim 1 : vector<8x384xf32>, i32 -> vector<8x384xf32>
    %c1_29 = arith.constant 1 : index
    %78 = memref.load %arg3[%c1_29] : memref<7xf32, #tpu.memory_space<smem>>
    %79 = vector.broadcast %78 : f32 to vector<8x384xf32>
    %80 = arith.mulf %79, %77 : vector<8x384xf32>
    %81 = arith.addf %76, %80 : vector<8x384xf32>
    %c1_i32_30 = arith.constant 1 : i32
    %82 = tpu.dynamic_rotate %68 by %c1_i32_30 dim 1 : vector<8x384xf32>, i32 -> vector<8x384xf32>
    %c2_31 = arith.constant 2 : index
    %83 = memref.load %arg3[%c2_31] : memref<7xf32, #tpu.memory_space<smem>>
    %84 = vector.broadcast %83 : f32 to vector<8x384xf32>
    %85 = arith.mulf %84, %82 : vector<8x384xf32>
    %86 = arith.addf %81, %85 : vector<8x384xf32>
    %c383_i32_32 = arith.constant 383 : i32
    %87 = tpu.dynamic_rotate %68 by %c383_i32_32 dim 1 : vector<8x384xf32>, i32 -> vector<8x384xf32>
    %c4_33 = arith.constant 4 : index
    %88 = memref.load %arg3[%c4_33] : memref<7xf32, #tpu.memory_space<smem>>
    %89 = vector.broadcast %88 : f32 to vector<8x384xf32>
    %90 = arith.mulf %89, %87 : vector<8x384xf32>
    %91 = arith.addf %86, %90 : vector<8x384xf32>
    %c382_i32_34 = arith.constant 382 : i32
    %92 = tpu.dynamic_rotate %68 by %c382_i32_34 dim 1 : vector<8x384xf32>, i32 -> vector<8x384xf32>
    %c5_35 = arith.constant 5 : index
    %93 = memref.load %arg3[%c5_35] : memref<7xf32, #tpu.memory_space<smem>>
    %94 = vector.broadcast %93 : f32 to vector<8x384xf32>
    %95 = arith.mulf %94, %92 : vector<8x384xf32>
    %96 = arith.addf %91, %95 : vector<8x384xf32>
    %c381_i32_36 = arith.constant 381 : i32
    %97 = tpu.dynamic_rotate %68 by %c381_i32_36 dim 1 : vector<8x384xf32>, i32 -> vector<8x384xf32>
    %c6_37 = arith.constant 6 : index
    %98 = memref.load %arg3[%c6_37] : memref<7xf32, #tpu.memory_space<smem>>
    %99 = vector.broadcast %98 : f32 to vector<8x384xf32>
    %100 = arith.mulf %99, %97 : vector<8x384xf32>
    %101 = arith.addf %96, %100 : vector<8x384xf32>
    %c0_38 = arith.constant 0 : index
    %102 = memref.load %arg4[%c0_38] : memref<1xf32, #tpu.memory_space<smem>>
    %103 = vector.broadcast %102 : f32 to vector<8x384xf32>
    %104 = arith.addf %101, %103 : vector<8x384xf32>
    %cst_39 = arith.constant 0.000000e+00 : f32
    %105 = vector.broadcast %cst_39 : f32 to vector<8x384xf32>
    %106 = arith.maximumf %104, %105 : vector<8x384xf32>
    %107 = vector.extract_strided_slice %106 {offsets = [0, 0], sizes = [8, 325], strides = [1, 1]} : vector<8x384xf32> to vector<8x325xf32>
    %c0_40 = arith.constant 0 : index
    %c0_41 = arith.constant 0 : index
    %108 = vector.load %arg10[%c0_40, %c0_41] : memref<8x325xf32, #tpu.memory_space<vmem>>, vector<8x325xf32>
    tpu.vector_store %arg10[%c0_40, %c0_41], %107 {strides = array<i32>} : memref<8x325xf32, #tpu.memory_space<vmem>>, vector<8x325xf32>,
    return
  }
  func.func @transform_0(%arg0: i32) -> i32 {
    %c0_i32 = arith.constant 0 : i32
    %c0_i32_0 = arith.constant 0 : i32
    return %c0_i32 : i32
  }
  func.func @transform_1(%arg0: i32) -> i32 {
    %c0_i32 = arith.constant 0 : i32
    %c0_i32_0 = arith.constant 0 : i32
    return %c0_i32 : i32
  }
  func.func @transform_2(%arg0: i32) -> i32 {
    %c0_i32 = arith.constant 0 : i32
    %c0_i32_0 = arith.constant 0 : i32
    return %c0_i32 : i32
  }
  func.func @transform_3(%arg0: i32) -> i32 {
    %c0_i32 = arith.constant 0 : i32
    %c0_i32_0 = arith.constant 0 : i32
    return %c0_i32 : i32
  }
  func.func @transform_4(%arg0: i32) -> (i32, i32) {
    %c0_i32 = arith.constant 0 : i32
    %c0_i32_0 = arith.constant 0 : i32
    return %arg0, %c0_i32 : i32, i32
  }
  func.func @transform_5(%arg0: i32) -> (i32, i32) {
    %c0_i32 = arith.constant 0 : i32
    %c0_i32_0 = arith.constant 0 : i32
    %c0_i32_1 = arith.constant 0 : i32
    return %c0_i32, %c0_i32_0 : i32, i32
  }
  func.func @transform_6(%arg0: i32) -> (i32, i32) {
    %c0_i32 = arith.constant 0 : i32
    %c0_i32_0 = arith.constant 0 : i32
    %c0_i32_1 = arith.constant 0 : i32
    return %c0_i32, %c0_i32_0 : i32, i32
  }
  func.func @transform_7(%arg0: i32) -> (i32, i32) {
    %c0_i32 = arith.constant 0 : i32
    %c0_i32_0 = arith.constant 0 : i32
    %c0_i32_1 = arith.constant 0 : i32
    return %c0_i32, %c0_i32_0 : i32, i32
  }
  func.func @transform_8(%arg0: i32) -> (i32, i32) {
    %c0_i32 = arith.constant 0 : i32
    %c0_i32_0 = arith.constant 0 : i32
    %c0_i32_1 = arith.constant 0 : i32
    return %c0_i32, %c0_i32_0 : i32, i32
  }
  func.func @transform_9(%arg0: i32) -> (i32, i32) {
    %c0_i32 = arith.constant 0 : i32
    %c0_i32_0 = arith.constant 0 : i32
    return %arg0, %c0_i32 : i32, i32
  }
}

</mosaic_0001>

<llo_original>
// kernel: neural_net_forward.1
$region0: #{neural_net_forward.1}
  #allocation0 [shape = 'u32[]', space=smem, size = 0x4, offset = 0x4, fixed_abs, tag = 'smem constant byte address 0x4 - core index']
  #allocation1 [shape = 'u32[144,128]{1,0:T(1,128)}', space=vmem, size = 0x12000, scoped, tag = 'internal scratch']
  #allocation2 [shape = 'f32[8,384]{1,0:T(8,128)}', space=vmem, size = 0x3000, scoped, tag = 'scratch operand']
  #allocation3 [shape = 'f32[1]{0:T(128)S(6)}', space=smem, size = 0x200, scoped, tag = 'scoped memory for neural_net_forward.1']
  #allocation4 [shape = 'f32[1]{0:T(128)S(6)}', space=smem, size = 0x200, scoped, tag = 'scoped memory for neural_net_forward.1']
  %s0 = inlined_call_operand.vmem [shape: f32[7], index: 0, kind: input, shape index: {}]
  %s1 = inlined_call_operand.<no memory space> [shape: f32[1], index: 1, kind: input, shape index: {}]
  %s2 = inlined_call_operand.vmem [shape: f32[7], index: 2, kind: input, shape index: {}]
  %s3 = inlined_call_operand.<no memory space> [shape: f32[1], index: 3, kind: input, shape index: {}]
  %s4 = inlined_call_operand.vmem [shape: f32[8,325], index: 4, kind: input, shape index: {}]
  %s5 = inlined_call_operand.hbm [shape: bf16[384,384], index: 5, kind: input, shape index: {}]
  %s6 = inlined_call_operand.vmem [shape: f32[1,384], index: 6, kind: input, shape index: {}]
  %s7 = inlined_call_operand.hbm [shape: bf16[384,384], index: 7, kind: input, shape index: {}]
  %s8 = inlined_call_operand.vmem [shape: f32[1,384], index: 8, kind: input, shape index: {}]
  %s9 = inlined_call_operand.vmem [shape: f32[8,325], index: 9, kind: output, shape index: {}]
  %s10 = sld [smem:[#allocation0]]
  $region62: #{neural_net_forward.1} parent=0
    _
  %s12 = ssub.s32 1, %s10
  %s13 = scalar_select 0, %s12, %s10
  %14 = sst [smem:[#allocation3]] %s1
  %15 = sst [smem:[#allocation4]] %s3
  $region1: #{neural_net_forward.1} parent=0
    #allocation5 [shape = 'u8[512]{0}', space=smem, size = 0x200, scoped, tag = 'input window, operand 0, single buffered']
    #allocation6 [shape = 's32[1]{0}', space=sflag, size = 0x4, scoped, tag = 'scoped memory for neural_net_forward.1']
    #allocation7 [shape = 's32[1]{0}', space=sflag, size = 0x4, scoped, tag = 'scoped memory for neural_net_forward.1']
    #allocation8 [shape = 'u8[512]{0}', space=smem, size = 0x200, scoped, tag = 'input window, operand 2, single buffered']
    #allocation9 [shape = 's32[1]{0}', space=sflag, size = 0x4, scoped, tag = 'scoped memory for neural_net_forward.1']
    #allocation10 [shape = 'u8[294912]{0}', space=vmem, size = 0x48000, scoped, tag = 'input window, operand 5, single buffered']
    #allocation11 [shape = 'u8[294912]{0}', space=vmem, size = 0x48000, scoped, tag = 'input window, operand 7, single buffered']
    #allocation12 [shape = 's32[1]{0}', space=sflag, size = 0x4, scoped, tag = 'scoped memory for neural_net_forward.1']
    %16 = vsyncpa [#allocation7], 0
    %17 = vsyncpa [#allocation9], 0
    %18 = vsyncpa [#allocation6], 0
    %19 = vsyncpa [#allocation12], 0
    // Predicated region
    $region2: #{neural_net_forward.1} parent=1 // pred_check
      _
    $region3: #{neural_net_forward.1} parent=1 // pred_check_branch
      %21 = sbr.rel (0) target = $region5
    $region4: #{neural_net_forward.1} parent=1 // pred_region
      %s23 = ssub.s32 16, 16
      %24 = vsyncadd [#allocation7], %s23
      %s26 = sshll.u32 %s0, 4
      %s27 = int_to_ptr.vmem [resolvable:$true] %s26
      %29 = dma.vmem_to_smem %s27, 16, [#allocation5], [#allocation7]
    $region5: #{neural_net_forward.1} parent=1 // pred_fallthru
      _
    // Predicated region
    $region6: #{neural_net_forward.1} parent=1 // pred_check
      _
    $region7: #{neural_net_forward.1} parent=1 // pred_check_branch
      %31 = sbr.rel (0) target = $region9
    $region8: #{neural_net_forward.1} parent=1 // pred_region
      _
    $region9: #{neural_net_forward.1} parent=1 // pred_fallthru
      _
    // Predicated region
    $region10: #{neural_net_forward.1} parent=1 // pred_check
      _
    $region11: #{neural_net_forward.1} parent=1 // pred_check_branch
      %33 = sbr.rel (0) target = $region13
    $region12: #{neural_net_forward.1} parent=1 // pred_region
      %s35 = ssub.s32 16, 16
      %36 = vsyncadd [#allocation9], %s35
      %s38 = sshll.u32 %s2, 4
      %s39 = int_to_ptr.vmem [resolvable:$true] %s38
      %41 = dma.vmem_to_smem %s39, 16, [#allocation8], [#allocation9]
    $region13: #{neural_net_forward.1} parent=1 // pred_fallthru
      _
    // Predicated region
    $region14: #{neural_net_forward.1} parent=1 // pred_check
      _
    $region15: #{neural_net_forward.1} parent=1 // pred_check_branch
      %43 = sbr.rel (0) target = $region17
    $region16: #{neural_net_forward.1} parent=1 // pred_region
      _
    $region17: #{neural_net_forward.1} parent=1 // pred_fallthru
      _
    // Predicated region
    $region18: #{neural_net_forward.1} parent=1 // pred_check
      _
    $region19: #{neural_net_forward.1} parent=1 // pred_check_branch
      %45 = sbr.rel (0) target = $region21
    $region20: #{neural_net_forward.1} parent=1 // pred_region
      _
    $region21: #{neural_net_forward.1} parent=1 // pred_fallthru
      _
    // Predicated region
    $region22: #{neural_net_forward.1} parent=1 // pred_check
      _
    $region23: #{neural_net_forward.1} parent=1 // pred_check_branch
      %47 = sbr.rel (0) target = $region25
    $region24: #{neural_net_forward.1} parent=1 // pred_region
      %s49 = ssub.s32 9216, 9216
      %50 = vsyncadd [#allocation6], %s49
      %s51 = sshll.u32 [#allocation10], 4
      %s52 = int_to_ptr.vmem [resolvable:$true] %s51
      %57 = dma.hbm_to_vmem [thread:$0]  %s5, 9216, %s52, [#allocation6], 192, 192, 12
    $region25: #{neural_net_forward.1} parent=1 // pred_fallthru
      _
    // Predicated region
    $region26: #{neural_net_forward.1} parent=1 // pred_check
      _
    $region27: #{neural_net_forward.1} parent=1 // pred_check_branch
      %59 = sbr.rel (0) target = $region29
    $region28: #{neural_net_forward.1} parent=1 // pred_region
      _
    $region29: #{neural_net_forward.1} parent=1 // pred_fallthru
      _
    // Predicated region
    $region30: #{neural_net_forward.1} parent=1 // pred_check
      _
    $region31: #{neural_net_forward.1} parent=1 // pred_check_branch
      %61 = sbr.rel (0) target = $region33
    $region32: #{neural_net_forward.1} parent=1 // pred_region
      %s63 = ssub.s32 9216, 9216
      %64 = vsyncadd [#allocation12], %s63
      %s65 = sshll.u32 [#allocation11], 4
      %s66 = int_to_ptr.vmem [resolvable:$true] %s65
      %71 = dma.hbm_to_vmem [thread:$0]  %s7, 9216, %s66, [#allocation12], 192, 192, 12
    $region33: #{neural_net_forward.1} parent=1 // pred_fallthru
      _
    // Predicated region
    $region34: #{neural_net_forward.1} parent=1 // pred_check
      _
    $region35: #{neural_net_forward.1} parent=1 // pred_check_branch
      %73 = sbr.rel (0) target = $region37
    $region36: #{neural_net_forward.1} parent=1 // pred_region
      _
    $region37: #{neural_net_forward.1} parent=1 // pred_fallthru
      _
    // Predicated region
    $region38: #{neural_net_forward.1} parent=1 // pred_check
      _
    $region39: #{neural_net_forward.1} parent=1 // pred_check_branch
      %75 = sbr.rel (0) target = $region41
    $region40: #{neural_net_forward.1} parent=1 // pred_region
      %76 = dma.done [#allocation7], 16
    $region41: #{neural_net_forward.1} parent=1 // pred_fallthru
      _
    // Predicated region
    $region42: #{neural_net_forward.1} parent=1 // pred_check
      _
    $region43: #{neural_net_forward.1} parent=1 // pred_check_branch
      %78 = sbr.rel (0) target = $region45
    $region44: #{neural_net_forward.1} parent=1 // pred_region
      %79 = dma.done [#allocation9], 16
    $region45: #{neural_net_forward.1} parent=1 // pred_fallthru
      _
    // Predicated region
    $region46: #{neural_net_forward.1} parent=1 // pred_check
      _
    $region47: #{neural_net_forward.1} parent=1 // pred_check_branch
      %81 = sbr.rel (0) target = $region49
    $region48: #{neural_net_forward.1} parent=1 // pred_region
      %82 = dma.done [#allocation6], 9216
    $region49: #{neural_net_forward.1} parent=1 // pred_fallthru
      _
    // Predicated region
    $region50: #{neural_net_forward.1} parent=1 // pred_check
      _
    $region51: #{neural_net_forward.1} parent=1 // pred_check_branch
      %84 = sbr.rel (0) target = $region53
    $region52: #{neural_net_forward.1} parent=1 // pred_region
      %85 = dma.done [#allocation12], 9216
    $region53: #{neural_net_forward.1} parent=1 // pred_fallthru
      _
    %86 = sfence
    %vm88 = vcmask 1048104
    %89 = vst.msk [vmem:[#allocation2 + $0x10] sm:$0xff] %vm88, 0.0
    %v90 = vld [vmem:[%s4] sm:$0xff]
    %v91 = vld [vmem:[%s4 + $0x8] sm:$0xff]
    %v92 = vld [vmem:[%s4 + $0x10] sm:$0xff]
    %93 = vst [vmem:[#allocation2] sm:$0xff] %v90
    %94 = vst [vmem:[#allocation2 + $0x8] sm:$0xff] %v91
    %vm95 = vcmask 564224
    %96 = vst.msk [vmem:[#allocation2 + $0x10] sm:$0xff] %vm95, %v92
    %v97 = vld [vmem:[#allocation2] sm:$0xff]
    %v98 = vld [vmem:[#allocation2 + $0x8] sm:$0xff]
    %v99 = vld [vmem:[#allocation2 + $0x10] sm:$0xff]
    %s100 = sld [smem:[#allocation5 + $0x3]]
    %v101 = vstv %s100
    %v102 = vmul.f32 %v101, %v97
    %v103 = vmul.f32 %v101, %v98
    %v104 = vmul.f32 %v101, %v99
    %105 = vrot.lane.b32.xlu0 %v97, 3
    %v106 = vpop.permute.xlu0 %105
    %107 = vrot.lane.b32.xlu0 %v98, 3
    %v108 = vpop.permute.xlu0 %107
    %109 = vrot.lane.b32.xlu0 %v99, 3
    %v110 = vpop.permute.xlu0 %109
    %v111 = vlaneseq
    %v112 = vand.u32 %v111, 127
    %vm113 = vcmp.lt.s32.totalorder %v112, 3
    %v114 = vsel %vm113, %v108, %v110
    %v115 = vsel %vm113, %v106, %v108
    %v116 = vsel %vm113, %v110, %v106
    %s117 = sld [smem:[#allocation5]]
    %v118 = vstv %s117
    %v119 = vmul.f32 %v118, %v116
    %v120 = vmul.f32 %v118, %v115
    %v121 = vmul.f32 %v118, %v114
    %v122 = vadd.f32 %v102, %v119
    %v123 = vadd.f32 %v103, %v120
    %v124 = vadd.f32 %v104, %v121
    %125 = vrot.lane.b32.xlu0 %v97, 2
    %v126 = vpop.permute.xlu0 %125
    %127 = vrot.lane.b32.xlu0 %v98, 2
    %v128 = vpop.permute.xlu0 %127
    %129 = vrot.lane.b32.xlu0 %v99, 2
    %v130 = vpop.permute.xlu0 %129
    %vm131 = vcmp.lt.s32.totalorder %v112, 2
    %v132 = vsel %vm131, %v128, %v130
    %v133 = vsel %vm131, %v126, %v128
    %v134 = vsel %vm131, %v130, %v126
    %s135 = sld [smem:[#allocation5 + $0x1]]
    %v136 = vstv %s135
    %v137 = vmul.f32 %v136, %v134
    %v138 = vmul.f32 %v136, %v133
    %v139 = vmul.f32 %v136, %v132
    %v140 = vadd.f32 %v122, %v137
    %v141 = vadd.f32 %v123, %v138
    %v142 = vadd.f32 %v124, %v139
    %143 = vrot.lane.b32.xlu0 %v97, 1
    %v144 = vpop.permute.xlu0 %143
    %145 = vrot.lane.b32.xlu0 %v98, 1
    %v146 = vpop.permute.xlu0 %145
    %147 = vrot.lane.b32.xlu0 %v99, 1
    %v148 = vpop.permute.xlu0 %147
    %vm149 = vcmp.lt.s32.totalorder %v112, 1
    %v150 = vsel %vm149, %v146, %v148
    %v151 = vsel %vm149, %v144, %v146
    %v152 = vsel %vm149, %v148, %v144
    %s153 = sld [smem:[#allocation5 + $0x2]]
    %v154 = vstv %s153
    %v155 = vmul.f32 %v154, %v152
    %v156 = vmul.f32 %v154, %v151
    %v157 = vmul.f32 %v154, %v150
    %v158 = vadd.f32 %v140, %v155
    %v159 = vadd.f32 %v141, %v156
    %v160 = vadd.f32 %v142, %v157
    %161 = vrot.lane.b32.xlu0 %v97, 127
    %v162 = vpop.permute.xlu0 %161
    %163 = vrot.lane.b32.xlu0 %v98, 127
    %v164 = vpop.permute.xlu0 %163
    %165 = vrot.lane.b32.xlu0 %v99, 127
    %v166 = vpop.permute.xlu0 %165
    %vm167 = vcmp.lt.s32.totalorder %v112, 127
    %v168 = vsel %vm167, %v164, %v166
    %v169 = vsel %vm167, %v162, %v164
    %v170 = vsel %vm167, %v166, %v162
    %s171 = sld [smem:[#allocation5 + $0x4]]
    %v172 = vstv %s171
    %v173 = vmul.f32 %v172, %v169
    %v174 = vmul.f32 %v172, %v168
    %v175 = vmul.f32 %v172, %v170
    %v176 = vadd.f32 %v158, %v173
    %v177 = vadd.f32 %v159, %v174
    %v178 = vadd.f32 %v160, %v175
    %179 = vrot.lane.b32.xlu0 %v97, 126
    %v180 = vpop.permute.xlu0 %179
    %181 = vrot.lane.b32.xlu0 %v98, 126
    %v182 = vpop.permute.xlu0 %181
    %183 = vrot.lane.b32.xlu0 %v99, 126
    %v184 = vpop.permute.xlu0 %183
    %vm185 = vcmp.lt.s32.totalorder %v112, 126
    %v186 = vsel %vm185, %v182, %v184
    %v187 = vsel %vm185, %v180, %v182
    %v188 = vsel %vm185, %v184, %v180
    %s189 = sld [smem:[#allocation5 + $0x5]]
    %v190 = vstv %s189
    %v191 = vmul.f32 %v190, %v187
    %v192 = vmul.f32 %v190, %v186
    %v193 = vmul.f32 %v190, %v188
    %v194 = vadd.f32 %v176, %v191
    %v195 = vadd.f32 %v177, %v192
    %v196 = vadd.f32 %v178, %v193
    %197 = vrot.lane.b32.xlu0 %v97, 125
    %v198 = vpop.permute.xlu0 %197
    %199 = vrot.lane.b32.xlu0 %v98, 125
    %v200 = vpop.permute.xlu0 %199
    %201 = vrot.lane.b32.xlu0 %v99, 125
    %v202 = vpop.permute.xlu0 %201
    %vm203 = vcmp.lt.s32.totalorder %v112, 125
    %v204 = vsel %vm203, %v200, %v202
    %v205 = vsel %vm203, %v198, %v200
    %v206 = vsel %vm203, %v202, %v198
    %s207 = sld [smem:[#allocation5 + $0x6]]
    %v208 = vstv %s207
    %v209 = vmul.f32 %v208, %v205
    %v210 = vmul.f32 %v208, %v204
    %v211 = vmul.f32 %v208, %v206
    %v212 = vadd.f32 %v194, %v209
    %v213 = vadd.f32 %v195, %v210
    %v214 = vadd.f32 %v196, %v211
    %s215 = sld [smem:[#allocation3]]
    %v216 = vstv %s215
    %v217 = vadd.f32 %v212, %v216
    %v218 = vadd.f32 %v213, %v216
    %v219 = vadd.f32 %v214, %v216
    %v220 = vmax.f32 %v217, 0.0
    %v221 = vmax.f32 %v218, 0.0
    %v222 = vmax.f32 %v219, 0.0
    %v223 = vpack.c.bf16 %v220, %v220
    %v224 = vpack.c.bf16 %v221, %v221
    %v225 = vpack.c.bf16 %v222, %v222
    %v226 = vld [vmem:[#allocation10] sm:$0xff]
    %v227 = vld [vmem:[#allocation10 + $0x8] sm:$0xf]
    %v228 = vld [vmem:[#allocation10 + $0xc] sm:$0xff]
    %v229 = vld [vmem:[#allocation10 + $0x14] sm:$0xf]
    %v230 = vld [vmem:[#allocation10 + $0x18] sm:$0xff]
    %v231 = vld [vmem:[#allocation10 + $0x20] sm:$0xf]
    %v232 = vld [vmem:[#allocation10 + $0x24] sm:$0xff]
    %v233 = vld [vmem:[#allocation10 + $0x2c] sm:$0xf]
    %v234 = vld [vmem:[#allocation10 + $0x30] sm:$0xff]
    %v235 = vld [vmem:[#allocation10 + $0x38] sm:$0xf]
    %v236 = vld [vmem:[#allocation10 + $0x3c] sm:$0xff]
    %v237 = vld [vmem:[#allocation10 + $0x44] sm:$0xf]
    %v238 = vld [vmem:[#allocation10 + $0x48] sm:$0xff]
    %v239 = vld [vmem:[#allocation10 + $0x50] sm:$0xf]
    %v240 = vld [vmem:[#allocation10 + $0x54] sm:$0xff]
    %v241 = vld [vmem:[#allocation10 + $0x5c] sm:$0xf]
    %v242 = vld [vmem:[#allocation10 + $0x60] sm:$0xff]
    %v243 = vld [vmem:[#allocation10 + $0x68] sm:$0xf]
    %v244 = vld [vmem:[#allocation10 + $0x6c] sm:$0xff]
    %v245 = vld [vmem:[#allocation10 + $0x74] sm:$0xf]
    %v246 = vld [vmem:[#allocation10 + $0x78] sm:$0xff]
    %v247 = vld [vmem:[#allocation10 + $0x80] sm:$0xf]
    %v248 = vld [vmem:[#allocation10 + $0x84] sm:$0xff]
    %v249 = vld [vmem:[#allocation10 + $0x8c] sm:$0xf]
    %v250 = vld [vmem:[#allocation10 + $0x90] sm:$0xff]
    %v251 = vld [vmem:[#allocation10 + $0x98] sm:$0xf]
    %v252 = vld [vmem:[#allocation10 + $0x9c] sm:$0xff]
    %v253 = vld [vmem:[#allocation10 + $0xa4] sm:$0xf]
    %v254 = vld [vmem:[#allocation10 + $0xa8] sm:$0xff]
    %v255 = vld [vmem:[#allocation10 + $0xb0] sm:$0xf]
    %v256 = vld [vmem:[#allocation10 + $0xb4] sm:$0xff]
    %v257 = vld [vmem:[#allocation10 + $0xbc] sm:$0xf]
    %v258 = vld [vmem:[#allocation10 + $0xc0] sm:$0xff]
    %v259 = vld [vmem:[#allocation10 + $0xc8] sm:$0xf]
    %v260 = vld [vmem:[#allocation10 + $0xcc] sm:$0xff]
    %v261 = vld [vmem:[#allocation10 + $0xd4] sm:$0xf]
    %v262 = vld [vmem:[#allocation10 + $0xd8] sm:$0xff]
    %v263 = vld [vmem:[#allocation10 + $0xe0] sm:$0xf]
    %v264 = vld [vmem:[#allocation10 + $0xe4] sm:$0xff]
    %v265 = vld [vmem:[#allocation10 + $0xec] sm:$0xf]
    %v266 = vld [vmem:[#allocation10 + $0xf0] sm:$0xff]
    %v267 = vld [vmem:[#allocation10 + $0xf8] sm:$0xf]
    %v268 = vld [vmem:[#allocation10 + $0xfc] sm:$0xff]
    %v269 = vld [vmem:[#allocation10 + $0x104] sm:$0xf]
    %v270 = vld [vmem:[#allocation10 + $0x108] sm:$0xff]
    %v271 = vld [vmem:[#allocation10 + $0x110] sm:$0xf]
    %v272 = vld [vmem:[#allocation10 + $0x114] sm:$0xff]
    %v273 = vld [vmem:[#allocation10 + $0x11c] sm:$0xf]
    %v274 = vld [vmem:[#allocation10 + $0x120] sm:$0xff]
    %v275 = vld [vmem:[#allocation10 + $0x128] sm:$0xf]
    %v276 = vld [vmem:[#allocation10 + $0x12c] sm:$0xff]
    %v277 = vld [vmem:[#allocation10 + $0x134] sm:$0xf]
    %v278 = vld [vmem:[#allocation10 + $0x138] sm:$0xff]
    %v279 = vld [vmem:[#allocation10 + $0x140] sm:$0xf]
    %v280 = vld [vmem:[#allocation10 + $0x144] sm:$0xff]
    %v281 = vld [vmem:[#allocation10 + $0x14c] sm:$0xf]
    %v282 = vld [vmem:[#allocation10 + $0x150] sm:$0xff]
    %v283 = vld [vmem:[#allocation10 + $0x158] sm:$0xf]
    %v284 = vld [vmem:[#allocation10 + $0x15c] sm:$0xff]
    %v285 = vld [vmem:[#allocation10 + $0x164] sm:$0xf]
    %v286 = vld [vmem:[#allocation10 + $0x168] sm:$0xff]
    %v287 = vld [vmem:[#allocation10 + $0x170] sm:$0xf]
    %v288 = vld [vmem:[#allocation10 + $0x174] sm:$0xff]
    %v289 = vld [vmem:[#allocation10 + $0x17c] sm:$0xf]
    %v290 = vld [vmem:[#allocation10 + $0x180] sm:$0xff]
    %v291 = vld [vmem:[#allocation10 + $0x188] sm:$0xf]
    %v292 = vld [vmem:[#allocation10 + $0x18c] sm:$0xff]
    %v293 = vld [vmem:[#allocation10 + $0x194] sm:$0xf]
    %v294 = vld [vmem:[#allocation10 + $0x198] sm:$0xff]
    %v295 = vld [vmem:[#allocation10 + $0x1a0] sm:$0xf]
    %v296 = vld [vmem:[#allocation10 + $0x1a4] sm:$0xff]
    %v297 = vld [vmem:[#allocation10 + $0x1ac] sm:$0xf]
    %v298 = vld [vmem:[#allocation10 + $0x1b0] sm:$0xff]
    %v299 = vld [vmem:[#allocation10 + $0x1b8] sm:$0xf]
    %v300 = vld [vmem:[#allocation10 + $0x1bc] sm:$0xff]
    %v301 = vld [vmem:[#allocation10 + $0x1c4] sm:$0xf]
    %v302 = vld [vmem:[#allocation10 + $0x1c8] sm:$0xff]
    %v303 = vld [vmem:[#allocation10 + $0x1d0] sm:$0xf]
    %v304 = vld [vmem:[#allocation10 + $0x1d4] sm:$0xff]
    %v305 = vld [vmem:[#allocation10 + $0x1dc] sm:$0xf]
    %v306 = vld [vmem:[#allocation10 + $0x1e0] sm:$0xff]
    %v307 = vld [vmem:[#allocation10 + $0x1e8] sm:$0xf]
    %v308 = vld [vmem:[#allocation10 + $0x1ec] sm:$0xff]
    %v309 = vld [vmem:[#allocation10 + $0x1f4] sm:$0xf]
    %v310 = vld [vmem:[#allocation10 + $0x1f8] sm:$0xff]
    %v311 = vld [vmem:[#allocation10 + $0x200] sm:$0xf]
    %v312 = vld [vmem:[#allocation10 + $0x204] sm:$0xff]
    %v313 = vld [vmem:[#allocation10 + $0x20c] sm:$0xf]
    %v314 = vld [vmem:[#allocation10 + $0x210] sm:$0xff]
    %v315 = vld [vmem:[#allocation10 + $0x218] sm:$0xf]
    %v316 = vld [vmem:[#allocation10 + $0x21c] sm:$0xff]
    %v317 = vld [vmem:[#allocation10 + $0x224] sm:$0xf]
    %v318 = vld [vmem:[#allocation10 + $0x228] sm:$0xff]
    %v319 = vld [vmem:[#allocation10 + $0x230] sm:$0xf]
    %v320 = vld [vmem:[#allocation10 + $0x234] sm:$0xff]
    %v321 = vld [vmem:[#allocation10 + $0x23c] sm:$0xf]
    %v322 = vld [vmem:[%s6] sm:$0x7]
    %v324 = vlaneseq
    %v325 = vshrl.u32 %v324, 7
    %v326 = vsub.s32 0, %v325
    %v327 = vrot.slane %v322, %v326
    %v328 = vlaneseq
    %v329 = vshrl.u32 %v328, 7
    %v330 = vsub.s32 1, %v329
    %v331 = vrot.slane %v322, %v330
    %v332 = vlaneseq
    %v333 = vshrl.u32 %v332, 7
    %v334 = vsub.s32 2, %v333
    %v335 = vrot.slane %v322, %v334
    %v435 = vunpack.c.l.b16 %v226
    %v436 = vunpack.c.h.b16 %v226
    %v437 = vunpack.c.l.b16 %v227
    %v438 = vunpack.c.l.b16 %v228
    %v439 = vunpack.c.h.b16 %v228
    %v440 = vunpack.c.l.b16 %v229
    %v441 = vunpack.c.l.b16 %v230
    %v442 = vunpack.c.h.b16 %v230
    %v443 = vunpack.c.l.b16 %v231
    %v444 = vunpack.c.l.b16 %v232
    %v445 = vunpack.c.h.b16 %v232
    %v446 = vunpack.c.l.b16 %v233
    %v447 = vunpack.c.l.b16 %v234
    %v448 = vunpack.c.h.b16 %v234
    %v449 = vunpack.c.l.b16 %v235
    %v450 = vunpack.c.l.b16 %v236
    %v451 = vunpack.c.h.b16 %v236
    %v452 = vunpack.c.l.b16 %v237
    %v453 = vunpack.c.l.b16 %v238
    %v454 = vunpack.c.h.b16 %v238
    %v455 = vunpack.c.l.b16 %v239
    %v456 = vunpack.c.l.b16 %v240
    %v457 = vunpack.c.h.b16 %v240
    %v458 = vunpack.c.l.b16 %v241
    %v459 = vunpack.c.l.b16 %v242
    %v460 = vunpack.c.h.b16 %v242
    %v461 = vunpack.c.l.b16 %v243
    %v462 = vunpack.c.l.b16 %v244
    %v463 = vunpack.c.h.b16 %v244
    %v464 = vunpack.c.l.b16 %v245
    %v465 = vunpack.c.l.b16 %v246
    %v466 = vunpack.c.h.b16 %v246
    %v467 = vunpack.c.l.b16 %v247
    %v468 = vunpack.c.l.b16 %v248
    %v469 = vunpack.c.h.b16 %v248
    %v470 = vunpack.c.l.b16 %v249
    %v471 = vunpack.c.l.b16 %v250
    %v472 = vunpack.c.h.b16 %v250
    %v473 = vunpack.c.l.b16 %v251
    %v474 = vunpack.c.l.b16 %v252
    %v475 = vunpack.c.h.b16 %v252
    %v476 = vunpack.c.l.b16 %v253
    %v477 = vunpack.c.l.b16 %v254
    %v478 = vunpack.c.h.b16 %v254
    %v479 = vunpack.c.l.b16 %v255
    %v480 = vunpack.c.l.b16 %v256
    %v481 = vunpack.c.h.b16 %v256
    %v482 = vunpack.c.l.b16 %v257
    %v483 = vunpack.c.l.b16 %v258
    %v484 = vunpack.c.h.b16 %v258
    %v485 = vunpack.c.l.b16 %v259
    %v486 = vunpack.c.l.b16 %v260
    %v487 = vunpack.c.h.b16 %v260
    %v488 = vunpack.c.l.b16 %v261
    %v489 = vunpack.c.l.b16 %v262
    %v490 = vunpack.c.h.b16 %v262
    %v491 = vunpack.c.l.b16 %v263
    %v492 = vunpack.c.l.b16 %v264
    %v493 = vunpack.c.h.b16 %v264
    %v494 = vunpack.c.l.b16 %v265
    %v495 = vunpack.c.l.b16 %v266
    %v496 = vunpack.c.h.b16 %v266
    %v497 = vunpack.c.l.b16 %v267
    %v498 = vunpack.c.l.b16 %v268
    %v499 = vunpack.c.h.b16 %v268
    %v500 = vunpack.c.l.b16 %v269
    %v501 = vunpack.c.l.b16 %v270
    %v502 = vunpack.c.h.b16 %v270
    %v503 = vunpack.c.l.b16 %v271
    %v504 = vunpack.c.l.b16 %v272
    %v505 = vunpack.c.h.b16 %v272
    %v506 = vunpack.c.l.b16 %v273
    %v507 = vunpack.c.l.b16 %v274
    %v508 = vunpack.c.h.b16 %v274
    %v509 = vunpack.c.l.b16 %v275
    %v510 = vunpack.c.l.b16 %v276
    %v511 = vunpack.c.h.b16 %v276
    %v512 = vunpack.c.l.b16 %v277
    %v513 = vunpack.c.l.b16 %v278
    %v514 = vunpack.c.h.b16 %v278
    %v515 = vunpack.c.l.b16 %v279
    %v516 = vunpack.c.l.b16 %v280
    %v517 = vunpack.c.h.b16 %v280
    %v518 = vunpack.c.l.b16 %v281
    %v519 = vunpack.c.l.b16 %v282
    %v520 = vunpack.c.h.b16 %v282
    %v521 = vunpack.c.l.b16 %v283
    %v522 = vunpack.c.l.b16 %v284
    %v523 = vunpack.c.h.b16 %v284
    %v524 = vunpack.c.l.b16 %v285
    %v525 = vunpack.c.l.b16 %v286
    %v526 = vunpack.c.h.b16 %v286
    %v527 = vunpack.c.l.b16 %v287
    %v528 = vunpack.c.l.b16 %v288
    %v529 = vunpack.c.h.b16 %v288
    %v530 = vunpack.c.l.b16 %v289
    %v531 = vunpack.c.l.b16 %v290
    %v532 = vunpack.c.h.b16 %v290
    %v533 = vunpack.c.l.b16 %v291
    %v534 = vunpack.c.l.b16 %v292
    %v535 = vunpack.c.h.b16 %v292
    %v536 = vunpack.c.l.b16 %v293
    %v537 = vunpack.c.l.b16 %v294
    %v538 = vunpack.c.h.b16 %v294
    %v539 = vunpack.c.l.b16 %v295
    %v540 = vunpack.c.l.b16 %v296
    %v541 = vunpack.c.h.b16 %v296
    %v542 = vunpack.c.l.b16 %v297
    %v543 = vunpack.c.l.b16 %v298
    %v544 = vunpack.c.h.b16 %v298
    %v545 = vunpack.c.l.b16 %v299
    %v546 = vunpack.c.l.b16 %v300
    %v547 = vunpack.c.h.b16 %v300
    %v548 = vunpack.c.l.b16 %v301
    %v549 = vunpack.c.l.b16 %v302
    %v550 = vunpack.c.h.b16 %v302
    %v551 = vunpack.c.l.b16 %v303
    %v552 = vunpack.c.l.b16 %v304
    %v553 = vunpack.c.h.b16 %v304
    %v554 = vunpack.c.l.b16 %v305
    %v555 = vunpack.c.l.b16 %v306
    %v556 = vunpack.c.h.b16 %v306
    %v557 = vunpack.c.l.b16 %v307
    %v558 = vunpack.c.l.b16 %v308
    %v559 = vunpack.c.h.b16 %v308
    %v560 = vunpack.c.l.b16 %v309
    %v561 = vunpack.c.l.b16 %v310
    %v562 = vunpack.c.h.b16 %v310
    %v563 = vunpack.c.l.b16 %v311
    %v564 = vunpack.c.l.b16 %v312
    %v565 = vunpack.c.h.b16 %v312
    %v566 = vunpack.c.l.b16 %v313
    %v567 = vunpack.c.l.b16 %v314
    %v568 = vunpack.c.h.b16 %v314
    %v569 = vunpack.c.l.b16 %v315
    %v570 = vunpack.c.l.b16 %v316
    %v571 = vunpack.c.h.b16 %v316
    %v572 = vunpack.c.l.b16 %v317
    %v573 = vunpack.c.l.b16 %v318
    %v574 = vunpack.c.h.b16 %v318
    %v575 = vunpack.c.l.b16 %v319
    %v576 = vunpack.c.l.b16 %v320
    %v577 = vunpack.c.h.b16 %v320
    %v578 = vunpack.c.l.b16 %v321
    %v579 = vpack.c.b16 %v438, %v435
    %v580 = vpack.c.b16 %v439, %v436
    %v581 = vpack.c.b16 %v440, %v437
    %v582 = vpack.c.b16 %v444, %v441
    %v583 = vpack.c.b16 %v445, %v442
    %v584 = vpack.c.b16 %v446, %v443
    %v585 = vpack.c.b16 %v450, %v447
    %v586 = vpack.c.b16 %v451, %v448
    %v587 = vpack.c.b16 %v452, %v449
    %v588 = vpack.c.b16 %v456, %v453
    %v589 = vpack.c.b16 %v457, %v454
    %v590 = vpack.c.b16 %v458, %v455
    %v591 = vpack.c.b16 %v462, %v459
    %v592 = vpack.c.b16 %v463, %v460
    %v593 = vpack.c.b16 %v464, %v461
    %v594 = vpack.c.b16 %v468, %v465
    %v595 = vpack.c.b16 %v469, %v466
    %v596 = vpack.c.b16 %v470, %v467
    %v597 = vpack.c.b16 %v474, %v471
    %v598 = vpack.c.b16 %v475, %v472
    %v599 = vpack.c.b16 %v476, %v473
    %v600 = vpack.c.b16 %v480, %v477
    %v601 = vpack.c.b16 %v481, %v478
    %v602 = vpack.c.b16 %v482, %v479
    %v603 = vpack.c.b16 %v486, %v483
    %v604 = vpack.c.b16 %v487, %v484
    %v605 = vpack.c.b16 %v488, %v485
    %v606 = vpack.c.b16 %v492, %v489
    %v607 = vpack.c.b16 %v493, %v490
    %v608 = vpack.c.b16 %v494, %v491
    %v609 = vpack.c.b16 %v498, %v495
    %v610 = vpack.c.b16 %v499, %v496
    %v611 = vpack.c.b16 %v500, %v497
    %v612 = vpack.c.b16 %v504, %v501
    %v613 = vpack.c.b16 %v505, %v502
    %v614 = vpack.c.b16 %v506, %v503
    %v615 = vpack.c.b16 %v510, %v507
    %v616 = vpack.c.b16 %v511, %v508
    %v617 = vpack.c.b16 %v512, %v509
    %v618 = vpack.c.b16 %v516, %v513
    %v619 = vpack.c.b16 %v517, %v514
    %v620 = vpack.c.b16 %v518, %v515
    %v621 = vpack.c.b16 %v522, %v519
    %v622 = vpack.c.b16 %v523, %v520
    %v623 = vpack.c.b16 %v524, %v521
    %v624 = vpack.c.b16 %v528, %v525
    %v625 = vpack.c.b16 %v529, %v526
    %v626 = vpack.c.b16 %v530, %v527
    %v627 = vpack.c.b16 %v534, %v531
    %v628 = vpack.c.b16 %v535, %v532
    %v629 = vpack.c.b16 %v536, %v533
    %v630 = vpack.c.b16 %v540, %v537
    %v631 = vpack.c.b16 %v541, %v538
    %v632 = vpack.c.b16 %v542, %v539
    %v633 = vpack.c.b16 %v546, %v543
    %v634 = vpack.c.b16 %v547, %v544
    %v635 = vpack.c.b16 %v548, %v545
    %v636 = vpack.c.b16 %v552, %v549
    %v637 = vpack.c.b16 %v553, %v550
    %v638 = vpack.c.b16 %v554, %v551
    %v639 = vpack.c.b16 %v558, %v555
    %v640 = vpack.c.b16 %v559, %v556
    %v641 = vpack.c.b16 %v560, %v557
    %v642 = vpack.c.b16 %v564, %v561
    %v643 = vpack.c.b16 %v565, %v562
    %v644 = vpack.c.b16 %v566, %v563
    %v645 = vpack.c.b16 %v570, %v567
    %v646 = vpack.c.b16 %v571, %v568
    %v647 = vpack.c.b16 %v572, %v569
    %v648 = vpack.c.b16 %v576, %v573
    %v649 = vpack.c.b16 %v577, %v574
    %v650 = vpack.c.b16 %v578, %v575
    %723 = vmatprep.subr.bf16.mxu0 %v601
    %724 = vmatpush1.bf16.msra.mxu0 %v600
    %725 = vmatprep.subr.bf16.mxu0 %v598
    %726 = vmatpush1.bf16.msra.mxu0 %v597
    %727 = vmatprep.subr.bf16.mxu0 %v595
    %728 = vmatpush1.bf16.msra.mxu0 %v594
    %729 = vmatprep.subr.bf16.mxu0 %v592
    %730 = vmatpush1.bf16.msra.mxu0 %v591
    %731 = vmatprep.subr.bf16.mxu0 %v589
    %732 = vmatpush1.bf16.msra.mxu0 %v588
    %733 = vmatprep.subr.bf16.mxu0 %v586
    %734 = vmatpush1.bf16.msra.mxu0 %v585
    %735 = vmatprep.subr.bf16.mxu0 %v583
    %736 = vmatpush1.bf16.msra.mxu0 %v582
    %737 = vmatprep.subr.bf16.mxu0 %v580
    %738 = vmatpush1.bf16.msra.mxu0 %v579
    %739 = vmatprep.subr.bf16.mxu0 %v625
    %740 = vmatpush2.bf16.msra.mxu0 %v624
    %741 = vmatprep.subr.bf16.mxu0 %v622
    %742 = vmatpush2.bf16.msra.mxu0 %v621
    %743 = vmatprep.subr.bf16.mxu0 %v619
    %744 = vmatpush2.bf16.msra.mxu0 %v618
    %745 = vmatprep.subr.bf16.mxu0 %v616
    %746 = vmatpush2.bf16.msra.mxu0 %v615
    %747 = vmatprep.subr.bf16.mxu0 %v613
    %748 = vmatpush2.bf16.msra.mxu0 %v612
    %749 = vmatprep.subr.bf16.mxu0 %v610
    %750 = vmatpush2.bf16.msra.mxu0 %v609
    %751 = vmatprep.subr.bf16.mxu0 %v607
    %752 = vmatpush2.bf16.msra.mxu0 %v606
    %753 = vmatprep.subr.bf16.mxu0 %v604
    %754 = vmatpush2.bf16.msra.mxu0 %v603
    %755 = vmatprep.mubr.bf16.mxu0 %v224
    %756 = vmatmul.mubr.bf16.gmra.mxu0 %v223
    %v757 = vpop.f32.mrf.mxu0
    %v758 = vadd.f32 %v327, %v757
    %v759 = vpop.f32.mrf.mxu0
    %v760 = vadd.f32 %v331, %v759
    %v761 = vpop.f32.mrf.mxu0
    %v762 = vpop.f32.mrf.mxu0
    %763 = vdwg.mxu0
    %764 = vmatprep.subr.bf16.mxu0 %v649
    %765 = vmatpush1.bf16.msra.mxu0 %v648
    %766 = vmatprep.subr.bf16.mxu0 %v646
    %767 = vmatpush1.bf16.msra.mxu0 %v645
    %768 = vmatprep.subr.bf16.mxu0 %v643
    %769 = vmatpush1.bf16.msra.mxu0 %v642
    %770 = vmatprep.subr.bf16.mxu0 %v640
    %771 = vmatpush1.bf16.msra.mxu0 %v639
    %772 = vmatprep.subr.bf16.mxu0 %v637
    %773 = vmatpush1.bf16.msra.mxu0 %v636
    %774 = vmatprep.subr.bf16.mxu0 %v634
    %775 = vmatpush1.bf16.msra.mxu0 %v633
    %776 = vmatprep.subr.bf16.mxu0 %v631
    %777 = vmatpush1.bf16.msra.mxu0 %v630
    %778 = vmatprep.subr.bf16.mxu0 %v628
    %779 = vmatpush1.bf16.msra.mxu0 %v627
    %780 = vmatprep.subr.bf16.mxu0 0
    %781 = vmatpush2.bf16.msra.mxu0 0
    %782 = vmatprep.subr.bf16.mxu0 0
    %783 = vmatpush2.bf16.msra.mxu0 0
    %784 = vmatprep.subr.bf16.mxu0 0
    %785 = vmatpush2.bf16.msra.mxu0 0
    %786 = vmatprep.subr.bf16.mxu0 0
    %787 = vmatpush2.bf16.msra.mxu0 0
    %788 = vmatprep.subr.bf16.mxu0 0
    %789 = vmatpush2.bf16.msra.mxu0 0
    %790 = vmatprep.subr.bf16.mxu0 0
    %791 = vmatpush2.bf16.msra.mxu0 0
    %792 = vmatprep.subr.bf16.mxu0 0
    %793 = vmatpush2.bf16.msra.mxu0 0
    %794 = vmatprep.subr.bf16.mxu0 0
    %795 = vmatpush2.bf16.msra.mxu0 0
    %796 = vmatprep.mubr.bf16.mxu0 0
    %797 = vmatmul.mubr.bf16.gmra.mxu0 %v225
    %v798 = vpop.f32.mrf.mxu0
    %v799 = vadd.f32 %v758, %v798
    %v800 = vpop.f32.mrf.mxu0
    %v801 = vadd.f32 %v760, %v800
    %v802 = vpop.f32.mrf.mxu0
    %v803 = vpop.f32.mrf.mxu0
    %804 = vdwg.mxu0
    %805 = vmatprep.subr.bf16.mxu0 0
    %806 = vmatpush1.bf16.msra.mxu0 %v602
    %807 = vmatprep.subr.bf16.mxu0 0
    %808 = vmatpush1.bf16.msra.mxu0 %v599
    %809 = vmatprep.subr.bf16.mxu0 0
    %810 = vmatpush1.bf16.msra.mxu0 %v596
    %811 = vmatprep.subr.bf16.mxu0 0
    %812 = vmatpush1.bf16.msra.mxu0 %v593
    %813 = vmatprep.subr.bf16.mxu0 0
    %814 = vmatpush1.bf16.msra.mxu0 %v590
    %815 = vmatprep.subr.bf16.mxu0 0
    %816 = vmatpush1.bf16.msra.mxu0 %v587
    %817 = vmatprep.subr.bf16.mxu0 0
    %818 = vmatpush1.bf16.msra.mxu0 %v584
    %819 = vmatprep.subr.bf16.mxu0 0
    %820 = vmatpush1.bf16.msra.mxu0 %v581
    %821 = vmatprep.subr.bf16.mxu0 0
    %822 = vmatpush2.bf16.msra.mxu0 %v626
    %823 = vmatprep.subr.bf16.mxu0 0
    %824 = vmatpush2.bf16.msra.mxu0 %v623
    %825 = vmatprep.subr.bf16.mxu0 0
    %826 = vmatpush2.bf16.msra.mxu0 %v620
    %827 = vmatprep.subr.bf16.mxu0 0
    %828 = vmatpush2.bf16.msra.mxu0 %v617
    %829 = vmatprep.subr.bf16.mxu0 0
    %830 = vmatpush2.bf16.msra.mxu0 %v614
    %831 = vmatprep.subr.bf16.mxu0 0
    %832 = vmatpush2.bf16.msra.mxu0 %v611
    %833 = vmatprep.subr.bf16.mxu0 0
    %834 = vmatpush2.bf16.msra.mxu0 %v608
    %835 = vmatprep.subr.bf16.mxu0 0
    %836 = vmatpush2.bf16.msra.mxu0 %v605
    %837 = vmatprep.mubr.bf16.mxu0 %v224
    %838 = vmatmul.mubr.bf16.gmra.mxu0 %v223
    %v839 = vpop.f32.mrf.mxu0
    %v840 = vadd.f32 %v335, %v839
    %v841 = vpop.f32.mrf.mxu0
    %v842 = vpop.f32.mrf.mxu0
    %v843 = vpop.f32.mrf.mxu0
    %844 = vdwg.mxu0
    %845 = vmatprep.subr.bf16.mxu0 0
    %846 = vmatpush1.bf16.msra.mxu0 %v650
    %847 = vmatprep.subr.bf16.mxu0 0
    %848 = vmatpush1.bf16.msra.mxu0 %v647
    %849 = vmatprep.subr.bf16.mxu0 0
    %850 = vmatpush1.bf16.msra.mxu0 %v644
    %851 = vmatprep.subr.bf16.mxu0 0
    %852 = vmatpush1.bf16.msra.mxu0 %v641
    %853 = vmatprep.subr.bf16.mxu0 0
    %854 = vmatpush1.bf16.msra.mxu0 %v638
    %855 = vmatprep.subr.bf16.mxu0 0
    %856 = vmatpush1.bf16.msra.mxu0 %v635
    %857 = vmatprep.subr.bf16.mxu0 0
    %858 = vmatpush1.bf16.msra.mxu0 %v632
    %859 = vmatprep.subr.bf16.mxu0 0
    %860 = vmatpush1.bf16.msra.mxu0 %v629
    %861 = vmatprep.subr.bf16.mxu0 0
    %862 = vmatpush2.bf16.msra.mxu0 0
    %863 = vmatprep.subr.bf16.mxu0 0
    %864 = vmatpush2.bf16.msra.mxu0 0
    %865 = vmatprep.subr.bf16.mxu0 0
    %866 = vmatpush2.bf16.msra.mxu0 0
    %867 = vmatprep.subr.bf16.mxu0 0
    %868 = vmatpush2.bf16.msra.mxu0 0
    %869 = vmatprep.subr.bf16.mxu0 0
    %870 = vmatpush2.bf16.msra.mxu0 0
    %871 = vmatprep.subr.bf16.mxu0 0
    %872 = vmatpush2.bf16.msra.mxu0 0
    %873 = vmatprep.subr.bf16.mxu0 0
    %874 = vmatpush2.bf16.msra.mxu0 0
    %875 = vmatprep.subr.bf16.mxu0 0
    %876 = vmatpush2.bf16.msra.mxu0 0
    %877 = vmatprep.mubr.bf16.mxu0 0
    %878 = vmatmul.mubr.bf16.gmra.mxu0 %v225
    %v879 = vpop.f32.mrf.mxu0
    %v880 = vadd.f32 %v840, %v879
    %v881 = vpop.f32.mrf.mxu0
    %v882 = vpop.f32.mrf.mxu0
    %v883 = vpop.f32.mrf.mxu0
    %884 = vdwg.mxu0
    %v885 = vmul.f32 %v799, 0.5
    %v886 = vmul.f32 %v801, 0.5
    %v887 = vmul.f32 %v880, 0.5
    %v888 = vtanh.pop %v885
    %v889 = vtanh.pop %v886
    %v890 = vtanh.pop %v887
    %v891 = vmul.f32 %v888, 0.5
    %v892 = vmul.f32 %v889, 0.5
    %v893 = vmul.f32 %v890, 0.5
    %v894 = vadd.f32 %v891, 0.5
    %v895 = vadd.f32 %v892, 0.5
    %v896 = vadd.f32 %v893, 0.5
    %v897 = vpack.c.bf16 %v894, %v894
    %v898 = vpack.c.bf16 %v895, %v895
    %v899 = vpack.c.bf16 %v896, %v896
    %v900 = vld [vmem:[#allocation11] sm:$0xff]
    %v901 = vld [vmem:[#allocation11 + $0x8] sm:$0xf]
    %v902 = vld [vmem:[#allocation11 + $0xc] sm:$0xff]
    %v903 = vld [vmem:[#allocation11 + $0x14] sm:$0xf]
    %v904 = vld [vmem:[#allocation11 + $0x18] sm:$0xff]
    %v905 = vld [vmem:[#allocation11 + $0x20] sm:$0xf]
    %v906 = vld [vmem:[#allocation11 + $0x24] sm:$0xff]
    %v907 = vld [vmem:[#allocation11 + $0x2c] sm:$0xf]
    %v908 = vld [vmem:[#allocation11 + $0x30] sm:$0xff]
    %v909 = vld [vmem:[#allocation11 + $0x38] sm:$0xf]
    %v910 = vld [vmem:[#allocation11 + $0x3c] sm:$0xff]
    %v911 = vld [vmem:[#allocation11 + $0x44] sm:$0xf]
    %v912 = vld [vmem:[#allocation11 + $0x48] sm:$0xff]
    %v913 = vld [vmem:[#allocation11 + $0x50] sm:$0xf]
    %v914 = vld [vmem:[#allocation11 + $0x54] sm:$0xff]
    %v915 = vld [vmem:[#allocation11 + $0x5c] sm:$0xf]
    %v916 = vld [vmem:[#allocation11 + $0x60] sm:$0xff]
    %v917 = vld [vmem:[#allocation11 + $0x68] sm:$0xf]
    %v918 = vld [vmem:[#allocation11 + $0x6c] sm:$0xff]
    %v919 = vld [vmem:[#allocation11 + $0x74] sm:$0xf]
    %v920 = vld [vmem:[#allocation11 + $0x78] sm:$0xff]
    %v921 = vld [vmem:[#allocation11 + $0x80] sm:$0xf]
    %v922 = vld [vmem:[#allocation11 + $0x84] sm:$0xff]
    %v923 = vld [vmem:[#allocation11 + $0x8c] sm:$0xf]
    %v924 = vld [vmem:[#allocation11 + $0x90] sm:$0xff]
    %v925 = vld [vmem:[#allocation11 + $0x98] sm:$0xf]
    %v926 = vld [vmem:[#allocation11 + $0x9c] sm:$0xff]
    %v927 = vld [vmem:[#allocation11 + $0xa4] sm:$0xf]
    %v928 = vld [vmem:[#allocation11 + $0xa8] sm:$0xff]
    %v929 = vld [vmem:[#allocation11 + $0xb0] sm:$0xf]
    %v930 = vld [vmem:[#allocation11 + $0xb4] sm:$0xff]
    %v931 = vld [vmem:[#allocation11 + $0xbc] sm:$0xf]
    %v932 = vld [vmem:[#allocation11 + $0xc0] sm:$0xff]
    %v933 = vld [vmem:[#allocation11 + $0xc8] sm:$0xf]
    %v934 = vld [vmem:[#allocation11 + $0xcc] sm:$0xff]
    %v935 = vld [vmem:[#allocation11 + $0xd4] sm:$0xf]
    %v936 = vld [vmem:[#allocation11 + $0xd8] sm:$0xff]
    %v937 = vld [vmem:[#allocation11 + $0xe0] sm:$0xf]
    %v938 = vld [vmem:[#allocation11 + $0xe4] sm:$0xff]
    %v939 = vld [vmem:[#allocation11 + $0xec] sm:$0xf]
    %v940 = vld [vmem:[#allocation11 + $0xf0] sm:$0xff]
    %v941 = vld [vmem:[#allocation11 + $0xf8] sm:$0xf]
    %v942 = vld [vmem:[#allocation11 + $0xfc] sm:$0xff]
    %v943 = vld [vmem:[#allocation11 + $0x104] sm:$0xf]
    %v944 = vld [vmem:[#allocation11 + $0x108] sm:$0xff]
    %v945 = vld [vmem:[#allocation11 + $0x110] sm:$0xf]
    %v946 = vld [vmem:[#allocation11 + $0x114] sm:$0xff]
    %v947 = vld [vmem:[#allocation11 + $0x11c] sm:$0xf]
    %v948 = vld [vmem:[#allocation11 + $0x120] sm:$0xff]
    %v949 = vld [vmem:[#allocation11 + $0x128] sm:$0xf]
    %v950 = vld [vmem:[#allocation11 + $0x12c] sm:$0xff]
    %v951 = vld [vmem:[#allocation11 + $0x134] sm:$0xf]
    %v952 = vld [vmem:[#allocation11 + $0x138] sm:$0xff]
    %v953 = vld [vmem:[#allocation11 + $0x140] sm:$0xf]
    %v954 = vld [vmem:[#allocation11 + $0x144] sm:$0xff]
    %v955 = vld [vmem:[#allocation11 + $0x14c] sm:$0xf]
    %v956 = vld [vmem:[#allocation11 + $0x150] sm:$0xff]
    %v957 = vld [vmem:[#allocation11 + $0x158] sm:$0xf]
    %v958 = vld [vmem:[#allocation11 + $0x15c] sm:$0xff]
    %v959 = vld [vmem:[#allocation11 + $0x164] sm:$0xf]
    %v960 = vld [vmem:[#allocation11 + $0x168] sm:$0xff]
    %v961 = vld [vmem:[#allocation11 + $0x170] sm:$0xf]
    %v962 = vld [vmem:[#allocation11 + $0x174] sm:$0xff]
    %v963 = vld [vmem:[#allocation11 + $0x17c] sm:$0xf]
    %v964 = vld [vmem:[#allocation11 + $0x180] sm:$0xff]
    %v965 = vld [vmem:[#allocation11 + $0x188] sm:$0xf]
    %v966 = vld [vmem:[#allocation11 + $0x18c] sm:$0xff]
    %v967 = vld [vmem:[#allocation11 + $0x194] sm:$0xf]
    %v968 = vld [vmem:[#allocation11 + $0x198] sm:$0xff]
    %v969 = vld [vmem:[#allocation11 + $0x1a0] sm:$0xf]
    %v970 = vld [vmem:[#allocation11 + $0x1a4] sm:$0xff]
    %v971 = vld [vmem:[#allocation11 + $0x1ac] sm:$0xf]
    %v972 = vld [vmem:[#allocation11 + $0x1b0] sm:$0xff]
    %v973 = vld [vmem:[#allocation11 + $0x1b8] sm:$0xf]
    %v974 = vld [vmem:[#allocation11 + $0x1bc] sm:$0xff]
    %v975 = vld [vmem:[#allocation11 + $0x1c4] sm:$0xf]
    %v976 = vld [vmem:[#allocation11 + $0x1c8] sm:$0xff]
    %v977 = vld [vmem:[#allocation11 + $0x1d0] sm:$0xf]
    %v978 = vld [vmem:[#allocation11 + $0x1d4] sm:$0xff]
    %v979 = vld [vmem:[#allocation11 + $0x1dc] sm:$0xf]
    %v980 = vld [vmem:[#allocation11 + $0x1e0] sm:$0xff]
    %v981 = vld [vmem:[#allocation11 + $0x1e8] sm:$0xf]
    %v982 = vld [vmem:[#allocation11 + $0x1ec] sm:$0xff]
    %v983 = vld [vmem:[#allocation11 + $0x1f4] sm:$0xf]
    %v984 = vld [vmem:[#allocation11 + $0x1f8] sm:$0xff]
    %v985 = vld [vmem:[#allocation11 + $0x200] sm:$0xf]
    %v986 = vld [vmem:[#allocation11 + $0x204] sm:$0xff]
    %v987 = vld [vmem:[#allocation11 + $0x20c] sm:$0xf]
    %v988 = vld [vmem:[#allocation11 + $0x210] sm:$0xff]
    %v989 = vld [vmem:[#allocation11 + $0x218] sm:$0xf]
    %v990 = vld [vmem:[#allocation11 + $0x21c] sm:$0xff]
    %v991 = vld [vmem:[#allocation11 + $0x224] sm:$0xf]
    %v992 = vld [vmem:[#allocation11 + $0x228] sm:$0xff]
    %v993 = vld [vmem:[#allocation11 + $0x230] sm:$0xf]
    %v994 = vld [vmem:[#allocation11 + $0x234] sm:$0xff]
    %v995 = vld [vmem:[#allocation11 + $0x23c] sm:$0xf]
    %v996 = vld [vmem:[%s8] sm:$0x7]
    %v998 = vlaneseq
    %v999 = vshrl.u32 %v998, 7
    %v1000 = vsub.s32 0, %v999
    %v1001 = vrot.slane %v996, %v1000
    %v1002 = vlaneseq
    %v1003 = vshrl.u32 %v1002, 7
    %v1004 = vsub.s32 1, %v1003
    %v1005 = vrot.slane %v996, %v1004
    %v1006 = vlaneseq
    %v1007 = vshrl.u32 %v1006, 7
    %v1008 = vsub.s32 2, %v1007
    %v1009 = vrot.slane %v996, %v1008
    %v1109 = vunpack.c.l.b16 %v900
    %v1110 = vunpack.c.h.b16 %v900
    %v1111 = vunpack.c.l.b16 %v901
    %v1112 = vunpack.c.l.b16 %v902
    %v1113 = vunpack.c.h.b16 %v902
    %v1114 = vunpack.c.l.b16 %v903
    %v1115 = vunpack.c.l.b16 %v904
    %v1116 = vunpack.c.h.b16 %v904
    %v1117 = vunpack.c.l.b16 %v905
    %v1118 = vunpack.c.l.b16 %v906
    %v1119 = vunpack.c.h.b16 %v906
    %v1120 = vunpack.c.l.b16 %v907
    %v1121 = vunpack.c.l.b16 %v908
    %v1122 = vunpack.c.h.b16 %v908
    %v1123 = vunpack.c.l.b16 %v909
    %v1124 = vunpack.c.l.b16 %v910
    %v1125 = vunpack.c.h.b16 %v910
    %v1126 = vunpack.c.l.b16 %v911
    %v1127 = vunpack.c.l.b16 %v912
    %v1128 = vunpack.c.h.b16 %v912
    %v1129 = vunpack.c.l.b16 %v913
    %v1130 = vunpack.c.l.b16 %v914
    %v1131 = vunpack.c.h.b16 %v914
    %v1132 = vunpack.c.l.b16 %v915
    %v1133 = vunpack.c.l.b16 %v916
    %v1134 = vunpack.c.h.b16 %v916
    %v1135 = vunpack.c.l.b16 %v917
    %v1136 = vunpack.c.l.b16 %v918
    %v1137 = vunpack.c.h.b16 %v918
    %v1138 = vunpack.c.l.b16 %v919
    %v1139 = vunpack.c.l.b16 %v920
    %v1140 = vunpack.c.h.b16 %v920
    %v1141 = vunpack.c.l.b16 %v921
    %v1142 = vunpack.c.l.b16 %v922
    %v1143 = vunpack.c.h.b16 %v922
    %v1144 = vunpack.c.l.b16 %v923
    %v1145 = vunpack.c.l.b16 %v924
    %v1146 = vunpack.c.h.b16 %v924
    %v1147 = vunpack.c.l.b16 %v925
    %v1148 = vunpack.c.l.b16 %v926
    %v1149 = vunpack.c.h.b16 %v926
    %v1150 = vunpack.c.l.b16 %v927
    %v1151 = vunpack.c.l.b16 %v928
    %v1152 = vunpack.c.h.b16 %v928
    %v1153 = vunpack.c.l.b16 %v929
    %v1154 = vunpack.c.l.b16 %v930
    %v1155 = vunpack.c.h.b16 %v930
    %v1156 = vunpack.c.l.b16 %v931
    %v1157 = vunpack.c.l.b16 %v932
    %v1158 = vunpack.c.h.b16 %v932
    %v1159 = vunpack.c.l.b16 %v933
    %v1160 = vunpack.c.l.b16 %v934
    %v1161 = vunpack.c.h.b16 %v934
    %v1162 = vunpack.c.l.b16 %v935
    %v1163 = vunpack.c.l.b16 %v936
    %v1164 = vunpack.c.h.b16 %v936
    %v1165 = vunpack.c.l.b16 %v937
    %v1166 = vunpack.c.l.b16 %v938
    %v1167 = vunpack.c.h.b16 %v938
    %v1168 = vunpack.c.l.b16 %v939
    %v1169 = vunpack.c.l.b16 %v940
    %v1170 = vunpack.c.h.b16 %v940
    %v1171 = vunpack.c.l.b16 %v941
    %v1172 = vunpack.c.l.b16 %v942
    %v1173 = vunpack.c.h.b16 %v942
    %v1174 = vunpack.c.l.b16 %v943
    %v1175 = vunpack.c.l.b16 %v944
    %v1176 = vunpack.c.h.b16 %v944
    %v1177 = vunpack.c.l.b16 %v945
    %v1178 = vunpack.c.l.b16 %v946
    %v1179 = vunpack.c.h.b16 %v946
    %v1180 = vunpack.c.l.b16 %v947
    %v1181 = vunpack.c.l.b16 %v948
    %v1182 = vunpack.c.h.b16 %v948
    %v1183 = vunpack.c.l.b16 %v949
    %v1184 = vunpack.c.l.b16 %v950
    %v1185 = vunpack.c.h.b16 %v950
    %v1186 = vunpack.c.l.b16 %v951
    %v1187 = vunpack.c.l.b16 %v952
    %v1188 = vunpack.c.h.b16 %v952
    %v1189 = vunpack.c.l.b16 %v953
    %v1190 = vunpack.c.l.b16 %v954
    %v1191 = vunpack.c.h.b16 %v954
    %v1192 = vunpack.c.l.b16 %v955
    %v1193 = vunpack.c.l.b16 %v956
    %v1194 = vunpack.c.h.b16 %v956
    %v1195 = vunpack.c.l.b16 %v957
    %v1196 = vunpack.c.l.b16 %v958
    %v1197 = vunpack.c.h.b16 %v958
    %v1198 = vunpack.c.l.b16 %v959
    %v1199 = vunpack.c.l.b16 %v960
    %v1200 = vunpack.c.h.b16 %v960
    %v1201 = vunpack.c.l.b16 %v961
    %v1202 = vunpack.c.l.b16 %v962
    %v1203 = vunpack.c.h.b16 %v962
    %v1204 = vunpack.c.l.b16 %v963
    %v1205 = vunpack.c.l.b16 %v964
    %v1206 = vunpack.c.h.b16 %v964
    %v1207 = vunpack.c.l.b16 %v965
    %v1208 = vunpack.c.l.b16 %v966
    %v1209 = vunpack.c.h.b16 %v966
    %v1210 = vunpack.c.l.b16 %v967
    %v1211 = vunpack.c.l.b16 %v968
    %v1212 = vunpack.c.h.b16 %v968
    %v1213 = vunpack.c.l.b16 %v969
    %v1214 = vunpack.c.l.b16 %v970
    %v1215 = vunpack.c.h.b16 %v970
    %v1216 = vunpack.c.l.b16 %v971
    %v1217 = vunpack.c.l.b16 %v972
    %v1218 = vunpack.c.h.b16 %v972
    %v1219 = vunpack.c.l.b16 %v973
    %v1220 = vunpack.c.l.b16 %v974
    %v1221 = vunpack.c.h.b16 %v974
    %v1222 = vunpack.c.l.b16 %v975
    %v1223 = vunpack.c.l.b16 %v976
    %v1224 = vunpack.c.h.b16 %v976
    %v1225 = vunpack.c.l.b16 %v977
    %v1226 = vunpack.c.l.b16 %v978
    %v1227 = vunpack.c.h.b16 %v978
    %v1228 = vunpack.c.l.b16 %v979
    %v1229 = vunpack.c.l.b16 %v980
    %v1230 = vunpack.c.h.b16 %v980
    %v1231 = vunpack.c.l.b16 %v981
    %v1232 = vunpack.c.l.b16 %v982
    %v1233 = vunpack.c.h.b16 %v982
    %v1234 = vunpack.c.l.b16 %v983
    %v1235 = vunpack.c.l.b16 %v984
    %v1236 = vunpack.c.h.b16 %v984
    %v1237 = vunpack.c.l.b16 %v985
    %v1238 = vunpack.c.l.b16 %v986
    %v1239 = vunpack.c.h.b16 %v986
    %v1240 = vunpack.c.l.b16 %v987
    %v1241 = vunpack.c.l.b16 %v988
    %v1242 = vunpack.c.h.b16 %v988
    %v1243 = vunpack.c.l.b16 %v989
    %v1244 = vunpack.c.l.b16 %v990
    %v1245 = vunpack.c.h.b16 %v990
    %v1246 = vunpack.c.l.b16 %v991
    %v1247 = vunpack.c.l.b16 %v992
    %v1248 = vunpack.c.h.b16 %v992
    %v1249 = vunpack.c.l.b16 %v993
    %v1250 = vunpack.c.l.b16 %v994
    %v1251 = vunpack.c.h.b16 %v994
    %v1252 = vunpack.c.l.b16 %v995
    %v1253 = vpack.c.b16 %v1112, %v1109
    %v1254 = vpack.c.b16 %v1113, %v1110
    %v1255 = vpack.c.b16 %v1114, %v1111
    %v1256 = vpack.c.b16 %v1118, %v1115
    %v1257 = vpack.c.b16 %v1119, %v1116
    %v1258 = vpack.c.b16 %v1120, %v1117
    %v1259 = vpack.c.b16 %v1124, %v1121
    %v1260 = vpack.c.b16 %v1125, %v1122
    %v1261 = vpack.c.b16 %v1126, %v1123
    %v1262 = vpack.c.b16 %v1130, %v1127
    %v1263 = vpack.c.b16 %v1131, %v1128
    %v1264 = vpack.c.b16 %v1132, %v1129
    %v1265 = vpack.c.b16 %v1136, %v1133
    %v1266 = vpack.c.b16 %v1137, %v1134
    %v1267 = vpack.c.b16 %v1138, %v1135
    %v1268 = vpack.c.b16 %v1142, %v1139
    %v1269 = vpack.c.b16 %v1143, %v1140
    %v1270 = vpack.c.b16 %v1144, %v1141
    %v1271 = vpack.c.b16 %v1148, %v1145
    %v1272 = vpack.c.b16 %v1149, %v1146
    %v1273 = vpack.c.b16 %v1150, %v1147
    %v1274 = vpack.c.b16 %v1154, %v1151
    %v1275 = vpack.c.b16 %v1155, %v1152
    %v1276 = vpack.c.b16 %v1156, %v1153
    %v1277 = vpack.c.b16 %v1160, %v1157
    %v1278 = vpack.c.b16 %v1161, %v1158
    %v1279 = vpack.c.b16 %v1162, %v1159
    %v1280 = vpack.c.b16 %v1166, %v1163
    %v1281 = vpack.c.b16 %v1167, %v1164
    %v1282 = vpack.c.b16 %v1168, %v1165
    %v1283 = vpack.c.b16 %v1172, %v1169
    %v1284 = vpack.c.b16 %v1173, %v1170
    %v1285 = vpack.c.b16 %v1174, %v1171
    %v1286 = vpack.c.b16 %v1178, %v1175
    %v1287 = vpack.c.b16 %v1179, %v1176
    %v1288 = vpack.c.b16 %v1180, %v1177
    %v1289 = vpack.c.b16 %v1184, %v1181
    %v1290 = vpack.c.b16 %v1185, %v1182
    %v1291 = vpack.c.b16 %v1186, %v1183
    %v1292 = vpack.c.b16 %v1190, %v1187
    %v1293 = vpack.c.b16 %v1191, %v1188
    %v1294 = vpack.c.b16 %v1192, %v1189
    %v1295 = vpack.c.b16 %v1196, %v1193
    %v1296 = vpack.c.b16 %v1197, %v1194
    %v1297 = vpack.c.b16 %v1198, %v1195
    %v1298 = vpack.c.b16 %v1202, %v1199
    %v1299 = vpack.c.b16 %v1203, %v1200
    %v1300 = vpack.c.b16 %v1204, %v1201
    %v1301 = vpack.c.b16 %v1208, %v1205
    %v1302 = vpack.c.b16 %v1209, %v1206
    %v1303 = vpack.c.b16 %v1210, %v1207
    %v1304 = vpack.c.b16 %v1214, %v1211
    %v1305 = vpack.c.b16 %v1215, %v1212
    %v1306 = vpack.c.b16 %v1216, %v1213
    %v1307 = vpack.c.b16 %v1220, %v1217
    %v1308 = vpack.c.b16 %v1221, %v1218
    %v1309 = vpack.c.b16 %v1222, %v1219
    %v1310 = vpack.c.b16 %v1226, %v1223
    %v1311 = vpack.c.b16 %v1227, %v1224
    %v1312 = vpack.c.b16 %v1228, %v1225
    %v1313 = vpack.c.b16 %v1232, %v1229
    %v1314 = vpack.c.b16 %v1233, %v1230
    %v1315 = vpack.c.b16 %v1234, %v1231
    %v1316 = vpack.c.b16 %v1238, %v1235
    %v1317 = vpack.c.b16 %v1239, %v1236
    %v1318 = vpack.c.b16 %v1240, %v1237
    %v1319 = vpack.c.b16 %v1244, %v1241
    %v1320 = vpack.c.b16 %v1245, %v1242
    %v1321 = vpack.c.b16 %v1246, %v1243
    %v1322 = vpack.c.b16 %v1250, %v1247
    %v1323 = vpack.c.b16 %v1251, %v1248
    %v1324 = vpack.c.b16 %v1252, %v1249
    %1397 = vmatprep.subr.bf16.mxu0 %v1275
    %1398 = vmatpush1.bf16.msra.mxu0 %v1274
    %1399 = vmatprep.subr.bf16.mxu0 %v1272
    %1400 = vmatpush1.bf16.msra.mxu0 %v1271
    %1401 = vmatprep.subr.bf16.mxu0 %v1269
    %1402 = vmatpush1.bf16.msra.mxu0 %v1268
    %1403 = vmatprep.subr.bf16.mxu0 %v1266
    %1404 = vmatpush1.bf16.msra.mxu0 %v1265
    %1405 = vmatprep.subr.bf16.mxu0 %v1263
    %1406 = vmatpush1.bf16.msra.mxu0 %v1262
    %1407 = vmatprep.subr.bf16.mxu0 %v1260
    %1408 = vmatpush1.bf16.msra.mxu0 %v1259
    %1409 = vmatprep.subr.bf16.mxu0 %v1257
    %1410 = vmatpush1.bf16.msra.mxu0 %v1256
    %1411 = vmatprep.subr.bf16.mxu0 %v1254
    %1412 = vmatpush1.bf16.msra.mxu0 %v1253
    %1413 = vmatprep.subr.bf16.mxu0 %v1299
    %1414 = vmatpush2.bf16.msra.mxu0 %v1298
    %1415 = vmatprep.subr.bf16.mxu0 %v1296
    %1416 = vmatpush2.bf16.msra.mxu0 %v1295
    %1417 = vmatprep.subr.bf16.mxu0 %v1293
    %1418 = vmatpush2.bf16.msra.mxu0 %v1292
    %1419 = vmatprep.subr.bf16.mxu0 %v1290
    %1420 = vmatpush2.bf16.msra.mxu0 %v1289
    %1421 = vmatprep.subr.bf16.mxu0 %v1287
    %1422 = vmatpush2.bf16.msra.mxu0 %v1286
    %1423 = vmatprep.subr.bf16.mxu0 %v1284
    %1424 = vmatpush2.bf16.msra.mxu0 %v1283
    %1425 = vmatprep.subr.bf16.mxu0 %v1281
    %1426 = vmatpush2.bf16.msra.mxu0 %v1280
    %1427 = vmatprep.subr.bf16.mxu0 %v1278
    %1428 = vmatpush2.bf16.msra.mxu0 %v1277
    %1429 = vmatprep.mubr.bf16.mxu0 %v898
    %1430 = vmatmul.mubr.bf16.gmra.mxu0 %v897
    %v1431 = vpop.f32.mrf.mxu0
    %v1432 = vadd.f32 %v1001, %v1431
    %v1433 = vpop.f32.mrf.mxu0
    %v1434 = vadd.f32 %v1005, %v1433
    %v1435 = vpop.f32.mrf.mxu0
    %v1436 = vpop.f32.mrf.mxu0
    %1437 = vdwg.mxu0
    %1438 = vmatprep.subr.bf16.mxu0 %v1323
    %1439 = vmatpush1.bf16.msra.mxu0 %v1322
    %1440 = vmatprep.subr.bf16.mxu0 %v1320
    %1441 = vmatpush1.bf16.msra.mxu0 %v1319
    %1442 = vmatprep.subr.bf16.mxu0 %v1317
    %1443 = vmatpush1.bf16.msra.mxu0 %v1316
    %1444 = vmatprep.subr.bf16.mxu0 %v1314
    %1445 = vmatpush1.bf16.msra.mxu0 %v1313
    %1446 = vmatprep.subr.bf16.mxu0 %v1311
    %1447 = vmatpush1.bf16.msra.mxu0 %v1310
    %1448 = vmatprep.subr.bf16.mxu0 %v1308
    %1449 = vmatpush1.bf16.msra.mxu0 %v1307
    %1450 = vmatprep.subr.bf16.mxu0 %v1305
    %1451 = vmatpush1.bf16.msra.mxu0 %v1304
    %1452 = vmatprep.subr.bf16.mxu0 %v1302
    %1453 = vmatpush1.bf16.msra.mxu0 %v1301
    %1454 = vmatprep.subr.bf16.mxu0 0
    %1455 = vmatpush2.bf16.msra.mxu0 0
    %1456 = vmatprep.subr.bf16.mxu0 0
    %1457 = vmatpush2.bf16.msra.mxu0 0
    %1458 = vmatprep.subr.bf16.mxu0 0
    %1459 = vmatpush2.bf16.msra.mxu0 0
    %1460 = vmatprep.subr.bf16.mxu0 0
    %1461 = vmatpush2.bf16.msra.mxu0 0
    %1462 = vmatprep.subr.bf16.mxu0 0
    %1463 = vmatpush2.bf16.msra.mxu0 0
    %1464 = vmatprep.subr.bf16.mxu0 0
    %1465 = vmatpush2.bf16.msra.mxu0 0
    %1466 = vmatprep.subr.bf16.mxu0 0
    %1467 = vmatpush2.bf16.msra.mxu0 0
    %1468 = vmatprep.subr.bf16.mxu0 0
    %1469 = vmatpush2.bf16.msra.mxu0 0
    %1470 = vmatprep.mubr.bf16.mxu0 0
    %1471 = vmatmul.mubr.bf16.gmra.mxu0 %v899
    %v1472 = vpop.f32.mrf.mxu0
    %v1473 = vadd.f32 %v1432, %v1472
    %v1474 = vpop.f32.mrf.mxu0
    %v1475 = vadd.f32 %v1434, %v1474
    %v1476 = vpop.f32.mrf.mxu0
    %v1477 = vpop.f32.mrf.mxu0
    %1478 = vdwg.mxu0
    %1479 = vmatprep.subr.bf16.mxu0 0
    %1480 = vmatpush1.bf16.msra.mxu0 %v1276
    %1481 = vmatprep.subr.bf16.mxu0 0
    %1482 = vmatpush1.bf16.msra.mxu0 %v1273
    %1483 = vmatprep.subr.bf16.mxu0 0
    %1484 = vmatpush1.bf16.msra.mxu0 %v1270
    %1485 = vmatprep.subr.bf16.mxu0 0
    %1486 = vmatpush1.bf16.msra.mxu0 %v1267
    %1487 = vmatprep.subr.bf16.mxu0 0
    %1488 = vmatpush1.bf16.msra.mxu0 %v1264
    %1489 = vmatprep.subr.bf16.mxu0 0
    %1490 = vmatpush1.bf16.msra.mxu0 %v1261
    %1491 = vmatprep.subr.bf16.mxu0 0
    %1492 = vmatpush1.bf16.msra.mxu0 %v1258
    %1493 = vmatprep.subr.bf16.mxu0 0
    %1494 = vmatpush1.bf16.msra.mxu0 %v1255
    %1495 = vmatprep.subr.bf16.mxu0 0
    %1496 = vmatpush2.bf16.msra.mxu0 %v1300
    %1497 = vmatprep.subr.bf16.mxu0 0
    %1498 = vmatpush2.bf16.msra.mxu0 %v1297
    %1499 = vmatprep.subr.bf16.mxu0 0
    %1500 = vmatpush2.bf16.msra.mxu0 %v1294
    %1501 = vmatprep.subr.bf16.mxu0 0
    %1502 = vmatpush2.bf16.msra.mxu0 %v1291
    %1503 = vmatprep.subr.bf16.mxu0 0
    %1504 = vmatpush2.bf16.msra.mxu0 %v1288
    %1505 = vmatprep.subr.bf16.mxu0 0
    %1506 = vmatpush2.bf16.msra.mxu0 %v1285
    %1507 = vmatprep.subr.bf16.mxu0 0
    %1508 = vmatpush2.bf16.msra.mxu0 %v1282
    %1509 = vmatprep.subr.bf16.mxu0 0
    %1510 = vmatpush2.bf16.msra.mxu0 %v1279
    %1511 = vmatprep.mubr.bf16.mxu0 %v898
    %1512 = vmatmul.mubr.bf16.gmra.mxu0 %v897
    %v1513 = vpop.f32.mrf.mxu0
    %v1514 = vadd.f32 %v1009, %v1513
    %v1515 = vpop.f32.mrf.mxu0
    %v1516 = vpop.f32.mrf.mxu0
    %v1517 = vpop.f32.mrf.mxu0
    %1518 = vdwg.mxu0
    %1519 = vmatprep.subr.bf16.mxu0 0
    %1520 = vmatpush1.bf16.msra.mxu0 %v1324
    %1521 = vmatprep.subr.bf16.mxu0 0
    %1522 = vmatpush1.bf16.msra.mxu0 %v1321
    %1523 = vmatprep.subr.bf16.mxu0 0
    %1524 = vmatpush1.bf16.msra.mxu0 %v1318
    %1525 = vmatprep.subr.bf16.mxu0 0
    %1526 = vmatpush1.bf16.msra.mxu0 %v1315
    %1527 = vmatprep.subr.bf16.mxu0 0
    %1528 = vmatpush1.bf16.msra.mxu0 %v1312
    %1529 = vmatprep.subr.bf16.mxu0 0
    %1530 = vmatpush1.bf16.msra.mxu0 %v1309
    %1531 = vmatprep.subr.bf16.mxu0 0
    %1532 = vmatpush1.bf16.msra.mxu0 %v1306
    %1533 = vmatprep.subr.bf16.mxu0 0
    %1534 = vmatpush1.bf16.msra.mxu0 %v1303
    %1535 = vmatprep.subr.bf16.mxu0 0
    %1536 = vmatpush2.bf16.msra.mxu0 0
    %1537 = vmatprep.subr.bf16.mxu0 0
    %1538 = vmatpush2.bf16.msra.mxu0 0
    %1539 = vmatprep.subr.bf16.mxu0 0
    %1540 = vmatpush2.bf16.msra.mxu0 0
    %1541 = vmatprep.subr.bf16.mxu0 0
    %1542 = vmatpush2.bf16.msra.mxu0 0
    %1543 = vmatprep.subr.bf16.mxu0 0
    %1544 = vmatpush2.bf16.msra.mxu0 0
    %1545 = vmatprep.subr.bf16.mxu0 0
    %1546 = vmatpush2.bf16.msra.mxu0 0
    %1547 = vmatprep.subr.bf16.mxu0 0
    %1548 = vmatpush2.bf16.msra.mxu0 0
    %1549 = vmatprep.subr.bf16.mxu0 0
    %1550 = vmatpush2.bf16.msra.mxu0 0
    %1551 = vmatprep.mubr.bf16.mxu0 0
    %1552 = vmatmul.mubr.bf16.gmra.mxu0 %v899
    %v1553 = vpop.f32.mrf.mxu0
    %v1554 = vadd.f32 %v1514, %v1553
    %v1555 = vpop.f32.mrf.mxu0
    %v1556 = vpop.f32.mrf.mxu0
    %v1557 = vpop.f32.mrf.mxu0
    %1558 = vdwg.mxu0
    %v1559 = vmul.f32 %v1473, 0.5
    %v1560 = vmul.f32 %v1475, 0.5
    %v1561 = vmul.f32 %v1554, 0.5
    %v1562 = vtanh.pop %v1559
    %v1563 = vtanh.pop %v1560
    %v1564 = vtanh.pop %v1561
    %v1565 = vmul.f32 %v1562, 0.5
    %v1566 = vmul.f32 %v1563, 0.5
    %v1567 = vmul.f32 %v1564, 0.5
    %v1568 = vadd.f32 %v1565, 0.5
    %v1569 = vadd.f32 %v1566, 0.5
    %v1570 = vadd.f32 %v1567, 0.5
    %s1571 = sld [smem:[#allocation8 + $0x3]]
    %v1572 = vstv %s1571
    %v1573 = vmul.f32 %v1572, %v1568
    %v1574 = vmul.f32 %v1572, %v1569
    %v1575 = vmul.f32 %v1572, %v1570
    %1576 = vrot.lane.b32.xlu0 %v1568, 3
    %v1577 = vpop.permute.xlu0 %1576
    %1578 = vrot.lane.b32.xlu0 %v1569, 3
    %v1579 = vpop.permute.xlu0 %1578
    %1580 = vrot.lane.b32.xlu0 %v1570, 3
    %v1581 = vpop.permute.xlu0 %1580
    %v1582 = vsel %vm113, %v1579, %v1581
    %v1583 = vsel %vm113, %v1577, %v1579
    %v1584 = vsel %vm113, %v1581, %v1577
    %s1585 = sld [smem:[#allocation8]]
    %v1586 = vstv %s1585
    %v1587 = vmul.f32 %v1586, %v1584
    %v1588 = vmul.f32 %v1586, %v1583
    %v1589 = vmul.f32 %v1586, %v1582
    %v1590 = vadd.f32 %v1573, %v1587
    %v1591 = vadd.f32 %v1574, %v1588
    %v1592 = vadd.f32 %v1575, %v1589
    %1593 = vrot.lane.b32.xlu0 %v1568, 2
    %v1594 = vpop.permute.xlu0 %1593
    %1595 = vrot.lane.b32.xlu0 %v1569, 2
    %v1596 = vpop.permute.xlu0 %1595
    %1597 = vrot.lane.b32.xlu0 %v1570, 2
    %v1598 = vpop.permute.xlu0 %1597
    %v1599 = vsel %vm131, %v1596, %v1598
    %v1600 = vsel %vm131, %v1594, %v1596
    %v1601 = vsel %vm131, %v1598, %v1594
    %s1602 = sld [smem:[#allocation8 + $0x1]]
    %v1603 = vstv %s1602
    %v1604 = vmul.f32 %v1603, %v1601
    %v1605 = vmul.f32 %v1603, %v1600
    %v1606 = vmul.f32 %v1603, %v1599
    %v1607 = vadd.f32 %v1590, %v1604
    %v1608 = vadd.f32 %v1591, %v1605
    %v1609 = vadd.f32 %v1592, %v1606
    %1610 = vrot.lane.b32.xlu0 %v1568, 1
    %v1611 = vpop.permute.xlu0 %1610
    %1612 = vrot.lane.b32.xlu0 %v1569, 1
    %v1613 = vpop.permute.xlu0 %1612
    %1614 = vrot.lane.b32.xlu0 %v1570, 1
    %v1615 = vpop.permute.xlu0 %1614
    %v1616 = vsel %vm149, %v1613, %v1615
    %v1617 = vsel %vm149, %v1611, %v1613
    %v1618 = vsel %vm149, %v1615, %v1611
    %s1619 = sld [smem:[#allocation8 + $0x2]]
    %v1620 = vstv %s1619
    %v1621 = vmul.f32 %v1620, %v1618
    %v1622 = vmul.f32 %v1620, %v1617
    %v1623 = vmul.f32 %v1620, %v1616
    %v1624 = vadd.f32 %v1607, %v1621
    %v1625 = vadd.f32 %v1608, %v1622
    %v1626 = vadd.f32 %v1609, %v1623
    %1627 = vrot.lane.b32.xlu0 %v1568, 127
    %v1628 = vpop.permute.xlu0 %1627
    %1629 = vrot.lane.b32.xlu0 %v1569, 127
    %v1630 = vpop.permute.xlu0 %1629
    %1631 = vrot.lane.b32.xlu0 %v1570, 127
    %v1632 = vpop.permute.xlu0 %1631
    %v1633 = vsel %vm167, %v1630, %v1632
    %v1634 = vsel %vm167, %v1628, %v1630
    %v1635 = vsel %vm167, %v1632, %v1628
    %s1636 = sld [smem:[#allocation8 + $0x4]]
    %v1637 = vstv %s1636
    %v1638 = vmul.f32 %v1637, %v1634
    %v1639 = vmul.f32 %v1637, %v1633
    %v1640 = vmul.f32 %v1637, %v1635
    %v1641 = vadd.f32 %v1624, %v1638
    %v1642 = vadd.f32 %v1625, %v1639
    %v1643 = vadd.f32 %v1626, %v1640
    %1644 = vrot.lane.b32.xlu0 %v1568, 126
    %v1645 = vpop.permute.xlu0 %1644
    %1646 = vrot.lane.b32.xlu0 %v1569, 126
    %v1647 = vpop.permute.xlu0 %1646
    %1648 = vrot.lane.b32.xlu0 %v1570, 126
    %v1649 = vpop.permute.xlu0 %1648
    %v1650 = vsel %vm185, %v1647, %v1649
    %v1651 = vsel %vm185, %v1645, %v1647
    %v1652 = vsel %vm185, %v1649, %v1645
    %s1653 = sld [smem:[#allocation8 + $0x5]]
    %v1654 = vstv %s1653
    %v1655 = vmul.f32 %v1654, %v1651
    %v1656 = vmul.f32 %v1654, %v1650
    %v1657 = vmul.f32 %v1654, %v1652
    %v1658 = vadd.f32 %v1641, %v1655
    %v1659 = vadd.f32 %v1642, %v1656
    %v1660 = vadd.f32 %v1643, %v1657
    %1661 = vrot.lane.b32.xlu0 %v1568, 125
    %v1662 = vpop.permute.xlu0 %1661
    %1663 = vrot.lane.b32.xlu0 %v1569, 125
    %v1664 = vpop.permute.xlu0 %1663
    %1665 = vrot.lane.b32.xlu0 %v1570, 125
    %v1666 = vpop.permute.xlu0 %1665
    %v1667 = vsel %vm203, %v1664, %v1666
    %v1668 = vsel %vm203, %v1662, %v1664
    %v1669 = vsel %vm203, %v1666, %v1662
    %s1670 = sld [smem:[#allocation8 + $0x6]]
    %v1671 = vstv %s1670
    %v1672 = vmul.f32 %v1671, %v1668
    %v1673 = vmul.f32 %v1671, %v1667
    %v1674 = vmul.f32 %v1671, %v1669
    %v1675 = vadd.f32 %v1658, %v1672
    %v1676 = vadd.f32 %v1659, %v1673
    %v1677 = vadd.f32 %v1660, %v1674
    %s1678 = sld [smem:[#allocation4]]
    %v1679 = vstv %s1678
    %v1680 = vadd.f32 %v1675, %v1679
    %v1681 = vadd.f32 %v1676, %v1679
    %v1682 = vadd.f32 %v1677, %v1679
    %v1683 = vmax.f32 %v1680, 0.0
    %v1684 = vmax.f32 %v1681, 0.0
    %v1685 = vmax.f32 %v1682, 0.0
    %1686 = vst [vmem:[%s9] sm:$0xff] %v1683
    %1687 = vst [vmem:[%s9 + $0x8] sm:$0xff] %v1684
    %1688 = vst.msk [vmem:[%s9 + $0x10] sm:$0xff] %vm95, %v1685
    // Predicated region
    $region54: #{neural_net_forward.1} parent=1 // pred_check
      _
    $region55: #{neural_net_forward.1} parent=1 // pred_check_branch
      %1690 = sbr.rel (0) target = $region57
    $region56: #{neural_net_forward.1} parent=1 // pred_region
      _
    $region57: #{neural_net_forward.1} parent=1 // pred_fallthru
      _
    // Predicated region
    $region58: #{neural_net_forward.1} parent=1 // pred_check
      _
    $region59: #{neural_net_forward.1} parent=1 // pred_check_branch
      %1692 = sbr.rel (0) target = $region61
    $region60: #{neural_net_forward.1} parent=1 // pred_region
      _
    $region61: #{neural_net_forward.1} parent=1 // pred_fallthru
      _
    %1693 = vsyncpa [#allocation6], 1
    %1694 = vsyncpa [#allocation12], 1
    %1695 = vsyncpa [#allocation7], 1
    %1696 = vsyncpa [#allocation9], 1

</llo_original>
